<compile_context>
chip_gen: v7x
topology: tpu7x:2x2x1
jax: 0.10.0
libtpu: 0.0.40
codegen_flags: <defaults>
</compile_context>

<pallas_src>
import functools
import math

import jax
import jax.numpy as jnp
from jax import lax
from jax.experimental import pallas as pl
from jax.experimental.pallas import tpu as pltpu


def _triplet_tile_kernel(xr_ref, xc_ref, tr_ref, tc_ref, sqr_ref, sqhc_ref,
                         hinge_ref, max_acc, min_acc, *,
                         margin, n, bm, bn, col_resident):
    i = pl.program_id(0)
    j = pl.program_id(1)

    # Reset the per-row-tile running reductions at the first column tile.
    @pl.when(j == 0)
    def _():
        max_acc[...] = jnp.full_like(max_acc, -jnp.inf)
        min_acc[...] = jnp.full_like(min_acc, jnp.inf)

    if col_resident:
        # Column copy of x lives fully in VMEM (fetched once); slice this tile's rows.
        off = pl.multiple_of(j * bn, 128)
        xc = xc_ref[pl.ds(off, bn), :]
    else:
        xc = xc_ref[...]

    # (bm, bn) gram tile on the MXU; both operands contract their last (lane) axis,
    # so the column tile is never transposed.
    gram = lax.dot_general(
        xr_ref[...], xc,
        dimension_numbers=(((1,), (1,)), ((), ())),
        preferred_element_type=jnp.float32)

    # s[r, c] = 0.5*||x_c||^2 - x_r.x_c  -- monotone in the squared distance.
    # Padded columns carry sqhc = +inf and label -1, so no explicit column mask is needed:
    # for real rows they are excluded from positives (label mismatch) and pushed to +inf
    # for negatives (never the min).
    score = sqhc_ref[...] - gram                        # (1,bn) bcast - (bm,bn)
    same = tr_ref[...] == tc_ref[...]                   # (bm,1) vs (1,bn) -> (bm,bn)

    # Lane-blocked running reductions: dense elementwise max/min against the (bm,128)
    # accumulators over static 128-lane slices -- no per-tile XLU reduce, no lane-masked
    # scratch stores.
    m_run = max_acc[...]
    n_run = min_acc[...]
    for c in range(bn // 128):
        sl = slice(c * 128, (c + 1) * 128)
        sc_sl = score[:, sl]
        sm_sl = same[:, sl]
        m_run = jnp.maximum(m_run, jnp.where(sm_sl, sc_sl, -jnp.inf))
        n_run = jnp.minimum(n_run, jnp.where(sm_sl, jnp.inf, sc_sl))
    max_acc[...] = m_run
    min_acc[...] = n_run

    # Finalize once per row tile: single cross-lane reduce per accumulator, add the row
    # term, clamp, sqrt (EUP), hinge, zero padded rows, dense lane-broadcast store.
    @pl.when(j == pl.num_programs(1) - 1)
    def _():
        sqr = sqr_ref[...]                              # (bm, 1) f32  ||x_r||^2
        d2_ap = sqr + 2.0 * jnp.max(max_acc[...], axis=1, keepdims=True)
        d2_an = sqr + 2.0 * jnp.min(min_acc[...], axis=1, keepdims=True)
        dist_ap = jnp.sqrt(jnp.maximum(d2_ap, 1e-12))
        dist_an = jnp.sqrt(jnp.maximum(d2_an, 1e-12))
        hinge = jnp.maximum(dist_ap - dist_an + jnp.float32(margin), 0.0)
        row_ok = (i * bm + lax.broadcasted_iota(jnp.int32, (bm, 1), 0)) < n
        hinge = jnp.where(row_ok, hinge, 0.0)           # padded rows (inf hinge) -> 0
        hinge_ref[...] = jnp.broadcast_to(hinge, (bm, 128))


def _round_up(v, m):
    return ((v + m - 1) // m) * m


def _vmem_cap_bytes():
    # ~3/4 of physical VMEM: 64 MiB on v7x, 128 MiB on v5e/v6e.  Fall back to the
    # v7x-safe value if the hardware query is unavailable.
    try:
        phys = int(pltpu.get_tpu_info().vmem_capacity_bytes)
    except Exception:
        phys = 64 << 20
    return (phys * 3) // 4


def triplet_loss_v1(inputs, targets, margin=0.3, *, block_m=512, block_n=512,
                    column_resident=None, gram_dtype=None):
    """inputs: (n, d) float features; targets: (n,) int class ids. Returns scalar loss.

    block_m / block_n must be multiples of 128.  column_resident=None picks automatically
    (keep the column copy of x in VMEM when it fits and there is more than one row tile).
    gram_dtype (e.g. jnp.bfloat16) optionally casts the MXU operands only; norms and all
    post-matmul math stay f32.
    """
    assert block_m % 128 == 0 and block_n % 128 == 0, "tile sizes must be multiples of 128"
    n, d = inputs.shape

    # Pad the batch axis up to a common multiple of the row/column tiles.
    n_pad = _round_up(n, 128)
    bm = min(block_m, n_pad)
    bn = min(block_n, n_pad)
    # Keep >= 2 row tiles when there is enough work so the "parallel" row axis can shard
    # across both v7x TensorCores (a harmless extra grid step on single-TC chips).
    if n_pad >= 256:
        while n_pad // bm < 2 and bm > 128:
            bm -= 128
    n_pad = _round_up(n_pad, math.lcm(bm, bn))
    grid_m = n_pad // bm
    grid_n = n_pad // bn

    # MXU operand dtype: pass-through by default (bf16 callers keep bf16 MXU / DMA).
    x = inputs if gram_dtype is None else inputs.astype(gram_dtype)
    if n_pad != n:
        x = jnp.pad(x, ((0, n_pad - n), (0, 0)))

    t = targets.astype(jnp.int32).reshape(n)
    if n_pad != n:
        t = jnp.pad(t, (0, n_pad - n), constant_values=-1)   # never matches a real label

    # Squared norms in f32, precomputed once.  Row view gets the full ||x||^2 (zero-padded,
    # padded rows are masked anyway); column view gets 0.5*||x||^2 with +inf padding so
    # padded columns need no in-kernel mask.
    xf = inputs.astype(jnp.float32)
    sq = jnp.sum(xf * xf, axis=1)                             # (n,)
    sq_half = 0.5 * sq
    if n_pad != n:
        sqr_full = jnp.pad(sq, (0, n_pad - n))
        sqhc_full = jnp.pad(sq_half, (0, n_pad - n), constant_values=float("inf"))
    else:
        sqr_full, sqhc_full = sq, sq_half

    labels_c = t.reshape(n_pad, 1)
    labels_r = t.reshape(1, n_pad)
    sqr_c = sqr_full.reshape(n_pad, 1)
    sqhc_r = sqhc_full.reshape(1, n_pad)

    itemsize = jnp.dtype(x.dtype).itemsize
    vmem_cap = _vmem_cap_bytes()

    def budget(resident):
        col_bytes = (n_pad if resident else bn) * d * itemsize
        return (2 * bm * d * itemsize          # double-buffered x row tiles
                + 2 * col_bytes                # x column tiles / resident column copy
                + 2 * (bm + bn) * 4 * 2        # label + squared-norm tiles
                + 2 * bm * 128 * 4             # output block
                + 2 * bm * 128 * 4             # (bm,128) accumulator scratch
                + 8 * bm * bn * 4)             # live (bm,bn) f32 intermediates

    if column_resident is None:
        # Residency only pays when the column side would otherwise be re-streamed
        # (grid_m > 1) and everything still fits with plenty of headroom.
        column_resident = (grid_m > 1) and (budget(True) <= vmem_cap // 2)
    vmem_limit = int(min(max(budget(column_resident) * 5 // 4, 32 << 20), vmem_cap))

    if column_resident:
        xc_spec = pl.BlockSpec((n_pad, d), lambda i, j: (0, 0))   # fetched once, stays in VMEM
    else:
        xc_spec = pl.BlockSpec((bn, d), lambda i, j: (j, 0))

    kernel = functools.partial(_triplet_tile_kernel, margin=float(margin),
                               n=n, bm=bm, bn=bn, col_resident=bool(column_resident))

    hinge = pl.pallas_call(
        kernel,
        out_shape=jax.ShapeDtypeStruct((n_pad, 128), jnp.float32),
        grid_spec=pltpu.PrefetchScalarGridSpec(
            num_scalar_prefetch=0,
            grid=(grid_m, grid_n),
            in_specs=[
                pl.BlockSpec((bm, d), lambda i, j: (i, 0)),   # x row tile
                xc_spec,                                      # x column tile / resident copy
                pl.BlockSpec((bm, 1), lambda i, j: (i, 0)),   # row-tile labels (column view)
                pl.BlockSpec((1, bn), lambda i, j: (0, j)),   # col-tile labels (row view)
                pl.BlockSpec((bm, 1), lambda i, j: (i, 0)),   # row-tile ||x||^2
                pl.BlockSpec((1, bn), lambda i, j: (0, j)),   # col-tile 0.5*||x||^2 (+inf pad)
            ],
            out_specs=pl.BlockSpec((bm, 128), lambda i, j: (i, 0)),
            scratch_shapes=[pltpu.VMEM((bm, 128), jnp.float32),
                            pltpu.VMEM((bm, 128), jnp.float32)],
        ),
        compiler_params=pltpu.CompilerParams(
            dimension_semantics=("parallel", "arbitrary"),
            vmem_limit_bytes=vmem_limit),
    )(x, x, labels_c, labels_r, sqr_c, sqhc_r)

    # All 128 lanes of a row carry the same hinge; padded rows are exactly 0.
    return jnp.sum(hinge[:, 0]) / jnp.float32(n)


def _reference_loss(inputs, targets, margin=0.3):
    # Pure-JAX reference mirroring the PyTorch module (discreteTarget=True, mutual=False).
    x = inputs.astype(jnp.float32)
    sq = jnp.sum(x * x, axis=1, keepdims=True)
    d2 = sq + sq.T - 2.0 * (x @ x.T)
    dist = jnp.sqrt(jnp.clip(d2, 1e-12, None))
    mask = targets[:, None] == targets[None, :]
    dist_ap = jnp.max(jnp.where(mask, dist, -jnp.inf), axis=1)
    dist_an = jnp.min(jnp.where(mask, jnp.inf, dist), axis=1)
    return jnp.mean(jnp.maximum(dist_ap - dist_an + margin, 0.0))


if __name__ == "__main__":
    key = jax.random.PRNGKey(0)
    # n deliberately NOT a multiple of the tile size -> exercises padding via the
    # -1 labels / +inf column norms and the padded-row masking.
    n, feat_dim = 200, 64
    inputs = jax.random.normal(key, (n, feat_dim), dtype=jnp.float32)
    # Deterministic labels: 4 classes, each with many members (positives & negatives exist).
    targets = (jnp.arange(n, dtype=jnp.int32) % 4).astype(jnp.int32)

    ref = _reference_loss(inputs, targets, margin=0.3)

    # Default path: 512-capped tiles -> bm lowered to 128 (2 row tiles for megacore),
    # bn=256; auto column residency (exercises the resident + multi-lane-slice paths).
    loss_a = jax.block_until_ready(triplet_loss_v1(inputs, targets, margin=0.3))
    assert jnp.allclose(loss_a, ref, atol=1e-4, rtol=1e-4), (loss_a, ref)

    # Streaming path: forced non-resident columns with 128x128 tiles -> 2x2 grid,
    # exercises the running accumulation across column tiles.
    loss_b = jax.block_until_ready(
        triplet_loss_v1(inputs, targets, margin=0.3, block_m=128, block_n=128,
                        column_resident=False))
    assert jnp.allclose(loss_b, ref, atol=1e-4, rtol=1e-4), (loss_b, ref)

    print("KERNEL_OK")
</pallas_src>

<mosaic_0001>
module attributes {stable_mosaic.version = 11 : i64} {
  func.func @_triplet_tile_kernel(%arg0: i32, %arg1: i32, %arg2: memref<128x64xf32, #tpu.memory_space<vmem>>, %arg3: memref<256x64xf32, #tpu.memory_space<vmem>>, %arg4: memref<128x1xi32, #tpu.memory_space<vmem>>, %arg5: memref<1x256xi32, #tpu.memory_space<vmem>>, %arg6: memref<128x1xf32, #tpu.memory_space<vmem>>, %arg7: memref<1x256xf32, #tpu.memory_space<vmem>>, %arg8: memref<128x128xf32, #tpu.memory_space<vmem>>, %arg9: memref<128x128xf32, #tpu.memory_space<vmem>>, %arg10: memref<128x128xf32, #tpu.memory_space<vmem>>) attributes {dimension_semantics = [#tpu.dimension_semantics<parallel>, #tpu.dimension_semantics<arbitrary>], iteration_bounds = array<i64: 2, 1>, scalar_prefetch = 0 : i64, scratch_operands = 2 : i64, tpu.core_type = #tpu.core_type<tc>, window_params = [{transform_indices = @transform_0, window_bounds = array<i64: 128, 64>}, {pipeline_mode = #tpu.pipeline_mode<synchronous>, transform_indices = @transform_1, window_bounds = array<i64: 256, 64>}, {transform_indices = @transform_2, window_bounds = array<i64: 128, 1>}, {transform_indices = @transform_3, window_bounds = array<i64: 1, 256>}, {transform_indices = @transform_4, window_bounds = array<i64: 128, 1>}, {transform_indices = @transform_5, window_bounds = array<i64: 1, 256>}, {transform_indices = @transform_6, window_bounds = array<i64: 128, 128>}]} {
    %c0_i32 = arith.constant 0 : i32
    %0 = arith.cmpi eq, %arg1, %c0_i32 : i32
    %1 = arith.extui %0 : i1 to i32
    %c0_i32_0 = arith.constant 0 : i32
    %2 = arith.cmpi ne, %1, %c0_i32_0 : i32
    scf.if %2 {
      %cst_23 = arith.constant 0xFF800000 : f32
      %40 = vector.broadcast %cst_23 : f32 to vector<128x128xf32>
      %c0_24 = arith.constant 0 : index
      %c0_25 = arith.constant 0 : index
      %41 = vector.load %arg9[%c0_24, %c0_25] : memref<128x128xf32, #tpu.memory_space<vmem>>, vector<128x128xf32>
      tpu.vector_store %arg9[%c0_24, %c0_25], %40 {strides = array<i32>} : memref<128x128xf32, #tpu.memory_space<vmem>>, vector<128x128xf32>,
      %cst_26 = arith.constant 0x7F800000 : f32
      %42 = vector.broadcast %cst_26 : f32 to vector<128x128xf32>
      %c0_27 = arith.constant 0 : index
      %c0_28 = arith.constant 0 : index
      %43 = vector.load %arg10[%c0_27, %c0_28] : memref<128x128xf32, #tpu.memory_space<vmem>>, vector<128x128xf32>
      tpu.vector_store %arg10[%c0_27, %c0_28], %42 {strides = array<i32>} : memref<128x128xf32, #tpu.memory_space<vmem>>, vector<128x128xf32>,
    } else {
    }
    %c256_i32 = arith.constant 256 : i32
    %3 = arith.muli %arg1, %c256_i32 : i32
    %4 = tpu.assume_multiple %3, 128 : i32
    %5 = arith.index_cast %4 : i32 to index
    %c0 = arith.constant 0 : index
    %6 = vector.load %arg3[%5, %c0] : memref<256x64xf32, #tpu.memory_space<vmem>>, vector<256x64xf32>
    %c0_1 = arith.constant 0 : index
    %c0_2 = arith.constant 0 : index
    %7 = vector.load %arg2[%c0_1, %c0_2] : memref<128x64xf32, #tpu.memory_space<vmem>>, vector<128x64xf32>
    %cst = arith.constant dense<0.000000e+00> : vector<128x256xf32>
    %8 = tpu.matmul %7, %6, %cst {dimension_numbers = #tpu.dot_dimension_numbers<[1], [1], [0], [0], [0, 0, 1, 0], [], []>} : vector<128x64xf32>, vector<256x64xf32>, vector<128x256xf32> -> vector<128x256xf32>
    %c0_3 = arith.constant 0 : index
    %c0_4 = arith.constant 0 : index
    %9 = vector.load %arg7[%c0_3, %c0_4] : memref<1x256xf32, #tpu.memory_space<vmem>>, vector<1x256xf32>
    %10 = vector.broadcast %9 : vector<1x256xf32> to vector<128x256xf32>
    %11 = arith.subf %10, %8 : vector<128x256xf32>
    %c0_5 = arith.constant 0 : index
    %c0_6 = arith.constant 0 : index
    %12 = vector.load %arg4[%c0_5, %c0_6] : memref<128x1xi32, #tpu.memory_space<vmem>>, vector<128x1xi32>
    %c0_7 = arith.constant 0 : index
    %c0_8 = arith.constant 0 : index
    %13 = vector.load %arg5[%c0_7, %c0_8] : memref<1x256xi32, #tpu.memory_space<vmem>>, vector<1x256xi32>
    %14 = vector.broadcast %12 : vector<128x1xi32> to vector<128x256xi32>
    %15 = vector.broadcast %13 : vector<1x256xi32> to vector<128x256xi32>
    %16 = arith.cmpi eq, %14, %15 : vector<128x256xi32>
    %c0_9 = arith.constant 0 : index
    %c0_10 = arith.constant 0 : index
    %17 = vector.load %arg9[%c0_9, %c0_10] : memref<128x128xf32, #tpu.memory_space<vmem>>, vector<128x128xf32>
    %c0_11 = arith.constant 0 : index
    %c0_12 = arith.constant 0 : index
    %18 = vector.load %arg10[%c0_11, %c0_12] : memref<128x128xf32, #tpu.memory_space<vmem>>, vector<128x128xf32>
    %19 = vector.extract_strided_slice %11 {offsets = [0, 0], sizes = [128, 128], strides = [1, 1]} : vector<128x256xf32> to vector<128x128xf32>
    %20 = vector.extract_strided_slice %16 {offsets = [0, 0], sizes = [128, 128], strides = [1, 1]} : vector<128x256xi1> to vector<128x128xi1>
    %cst_13 = arith.constant 0xFF800000 : f32
    %21 = vector.broadcast %cst_13 : f32 to vector<128x128xf32>
    %22 = arith.select %20, %19, %21 : vector<128x128xi1>, vector<128x128xf32>
    %23 = arith.maximumf %17, %22 : vector<128x128xf32>
    %cst_14 = arith.constant 0x7F800000 : f32
    %24 = vector.broadcast %cst_14 : f32 to vector<128x128xf32>
    %25 = arith.select %20, %24, %19 : vector<128x128xi1>, vector<128x128xf32>
    %26 = arith.minimumf %18, %25 : vector<128x128xf32>
    %27 = vector.extract_strided_slice %11 {offsets = [0, 128], sizes = [128, 128], strides = [1, 1]} : vector<128x256xf32> to vector<128x128xf32>
    %28 = vector.extract_strided_slice %16 {offsets = [0, 128], sizes = [128, 128], strides = [1, 1]} : vector<128x256xi1> to vector<128x128xi1>
    %cst_15 = arith.constant 0xFF800000 : f32
    %29 = vector.broadcast %cst_15 : f32 to vector<128x128xf32>
    %30 = arith.select %28, %27, %29 : vector<128x128xi1>, vector<128x128xf32>
    %31 = arith.maximumf %23, %30 : vector<128x128xf32>
    %cst_16 = arith.constant 0x7F800000 : f32
    %32 = vector.broadcast %cst_16 : f32 to vector<128x128xf32>
    %33 = arith.select %28, %32, %27 : vector<128x128xi1>, vector<128x128xf32>
    %34 = arith.minimumf %26, %33 : vector<128x128xf32>
    %c0_17 = arith.constant 0 : index
    %c0_18 = arith.constant 0 : index
    %35 = vector.load %arg9[%c0_17, %c0_18] : memref<128x128xf32, #tpu.memory_space<vmem>>, vector<128x128xf32>
    tpu.vector_store %arg9[%c0_17, %c0_18], %31 {strides = array<i32>} : memref<128x128xf32, #tpu.memory_space<vmem>>, vector<128x128xf32>,
    %c0_19 = arith.constant 0 : index
    %c0_20 = arith.constant 0 : index
    %36 = vector.load %arg10[%c0_19, %c0_20] : memref<128x128xf32, #tpu.memory_space<vmem>>, vector<128x128xf32>
    tpu.vector_store %arg10[%c0_19, %c0_20], %34 {strides = array<i32>} : memref<128x128xf32, #tpu.memory_space<vmem>>, vector<128x128xf32>,
    %c0_i32_21 = arith.constant 0 : i32
    %37 = arith.cmpi eq, %arg1, %c0_i32_21 : i32
    %38 = arith.extui %37 : i1 to i32
    %c0_i32_22 = arith.constant 0 : i32
    %39 = arith.cmpi ne, %38, %c0_i32_22 : i32
    scf.if %39 {
      %c0_23 = arith.constant 0 : index
      %c0_24 = arith.constant 0 : index
      %40 = vector.load %arg6[%c0_23, %c0_24] : memref<128x1xf32, #tpu.memory_space<vmem>>, vector<128x1xf32>
      %c0_25 = arith.constant 0 : index
      %c0_26 = arith.constant 0 : index
      %41 = vector.load %arg9[%c0_25, %c0_26] : memref<128x128xf32, #tpu.memory_space<vmem>>, vector<128x128xf32>
      %cst_27 = arith.constant dense<0xFF800000> : vector<128xf32>
      %42 = vector.multi_reduction <maximumf>, %41, %cst_27 [1] : vector<128x128xf32> to vector<128xf32>
      %43 = vector.shape_cast %42 : vector<128xf32> to vector<128x1xf32>
      %cst_28 = arith.constant 2.000000e+00 : f32
      %44 = vector.broadcast %cst_28 : f32 to vector<128x1xf32>
      %45 = arith.mulf %44, %43 : vector<128x1xf32>
      %46 = arith.addf %40, %45 : vector<128x1xf32>
      %c0_29 = arith.constant 0 : index
      %c0_30 = arith.constant 0 : index
      %47 = vector.load %arg10[%c0_29, %c0_30] : memref<128x128xf32, #tpu.memory_space<vmem>>, vector<128x128xf32>
      %cst_31 = arith.constant dense<0x7F800000> : vector<128xf32>
      %48 = vector.multi_reduction <minimumf>, %47, %cst_31 [1] : vector<128x128xf32> to vector<128xf32>
      %49 = vector.shape_cast %48 : vector<128xf32> to vector<128x1xf32>
      %cst_32 = arith.constant 2.000000e+00 : f32
      %50 = vector.broadcast %cst_32 : f32 to vector<128x1xf32>
      %51 = arith.mulf %50, %49 : vector<128x1xf32>
      %52 = arith.addf %40, %51 : vector<128x1xf32>
      %cst_33 = arith.constant 9.99999996E-13 : f32
      %53 = vector.broadcast %cst_33 : f32 to vector<128x1xf32>
      %54 = arith.maximumf %46, %53 : vector<128x1xf32>
      %55 = math.sqrt %54 : vector<128x1xf32>
      %cst_34 = arith.constant 9.99999996E-13 : f32
      %56 = vector.broadcast %cst_34 : f32 to vector<128x1xf32>
      %57 = arith.maximumf %52, %56 : vector<128x1xf32>
      %58 = math.sqrt %57 : vector<128x1xf32>
      %59 = arith.subf %55, %58 : vector<128x1xf32>
      %cst_35 = arith.constant 3.000000e-01 : f32
      %60 = vector.broadcast %cst_35 : f32 to vector<128x1xf32>
      %61 = arith.addf %59, %60 : vector<128x1xf32>
      %cst_36 = arith.constant 0.000000e+00 : f32
      %62 = vector.broadcast %cst_36 : f32 to vector<128x1xf32>
      %63 = arith.maximumf %61, %62 : vector<128x1xf32>
      %c128_i32 = arith.constant 128 : i32
      %64 = arith.muli %arg0, %c128_i32 : i32
      %65 = tpu.iota {dimensions = array<i32: 0>} : vector<128x1xi32>
      %66 = vector.broadcast %64 : i32 to vector<128x1xi32>
      %67 = arith.addi %66, %65 : vector<128x1xi32>
      %c200_i32 = arith.constant 200 : i32
      %68 = vector.broadcast %c200_i32 : i32 to vector<128x1xi32>
      %69 = arith.cmpi slt, %67, %68 : vector<128x1xi32>
      %cst_37 = arith.constant 0.000000e+00 : f32
      %70 = vector.broadcast %cst_37 : f32 to vector<128x1xf32>
      %71 = arith.select %69, %63, %70 : vector<128x1xi1>, vector<128x1xf32>
      %72 = vector.shape_cast %71 : vector<128x1xf32> to vector<128x1xf32>
      %73 = vector.broadcast %72 : vector<128x1xf32> to vector<128x128xf32>
      %c0_38 = arith.constant 0 : index
      %c0_39 = arith.constant 0 : index
      %74 = vector.load %arg8[%c0_38, %c0_39] : memref<128x128xf32, #tpu.memory_space<vmem>>, vector<128x128xf32>
      tpu.vector_store %arg8[%c0_38, %c0_39], %73 {strides = array<i32>} : memref<128x128xf32, #tpu.memory_space<vmem>>, vector<128x128xf32>,
    } else {
    }
    return
  }
  func.func @transform_0(%arg0: i32, %arg1: i32) -> (i32, i32) {
    %c0_i32 = arith.constant 0 : i32
    %c0_i32_0 = arith.constant 0 : i32
    return %arg0, %c0_i32 : i32, i32
  }
  func.func @transform_1(%arg0: i32, %arg1: i32) -> (i32, i32) {
    %c0_i32 = arith.constant 0 : i32
    %c0_i32_0 = arith.constant 0 : i32
    %c0_i32_1 = arith.constant 0 : i32
    return %c0_i32, %c0_i32_0 : i32, i32
  }
  func.func @transform_2(%arg0: i32, %arg1: i32) -> (i32, i32) {
    %c0_i32 = arith.constant 0 : i32
    %c0_i32_0 = arith.constant 0 : i32
    return %arg0, %c0_i32 : i32, i32
  }
  func.func @transform_3(%arg0: i32, %arg1: i32) -> (i32, i32) {
    %c0_i32 = arith.constant 0 : i32
    %c0_i32_0 = arith.constant 0 : i32
    return %c0_i32, %arg1 : i32, i32
  }
  func.func @transform_4(%arg0: i32, %arg1: i32) -> (i32, i32) {
    %c0_i32 = arith.constant 0 : i32
    %c0_i32_0 = arith.constant 0 : i32
    return %arg0, %c0_i32 : i32, i32
  }
  func.func @transform_5(%arg0: i32, %arg1: i32) -> (i32, i32) {
    %c0_i32 = arith.constant 0 : i32
    %c0_i32_0 = arith.constant 0 : i32
    return %c0_i32, %arg1 : i32, i32
  }
  func.func @transform_6(%arg0: i32, %arg1: i32) -> (i32, i32) {
    %c0_i32 = arith.constant 0 : i32
    %c0_i32_0 = arith.constant 0 : i32
    return %arg0, %c0_i32 : i32, i32
  }
}

</mosaic_0001>

<llo_original>
// kernel: tpu_custom_call.1
$region0: #{tpu_custom_call.1}
  #allocation0 [shape = 'u32[]', space=smem, size = 0x4, offset = 0x4, fixed_abs, tag = 'smem constant byte address 0x4 - core index']
  #allocation1 [shape = 'u32[144,128]{1,0:T(1,128)}', space=vmem, size = 0x12000, scoped, tag = 'internal scratch']
  #allocation2 [shape = 'f32[128,128]{1,0:T(8,128)}', space=vmem, size = 0x10000, scoped, tag = 'scratch operand']
  #allocation3 [shape = 'f32[128,128]{1,0:T(8,128)}', space=vmem, size = 0x10000, scoped, tag = 'scratch operand']
  %s0 = inlined_call_operand.vmem [shape: f32[256,64], index: 0, kind: input, shape index: {}]
  %s1 = inlined_call_operand.vmem [shape: f32[256,64], index: 1, kind: input, shape index: {}]
  %s2 = inlined_call_operand.vmem [shape: s32[256,1], index: 2, kind: input, shape index: {}]
  %s3 = inlined_call_operand.vmem [shape: s32[1,256], index: 3, kind: input, shape index: {}]
  %s4 = inlined_call_operand.vmem [shape: f32[256,1], index: 4, kind: input, shape index: {}]
  %s5 = inlined_call_operand.vmem [shape: f32[1,256], index: 5, kind: input, shape index: {}]
  %s6 = inlined_call_operand.hbm [shape: f32[256,128], index: 6, kind: output, shape index: {}]
  %s7 = sld [smem:[#allocation0]]
  $region65: #{tpu_custom_call.1} parent=0
    _
  %s9 = ssub.s32 1, %s7
  %s10 = scalar_select 0, %s9, %s7
  $region1: #{tpu_custom_call.1} parent=0
    #allocation4 [shape = 'u8[131072]{0}', space=vmem, size = 0x20000, scoped, tag = 'output window, operand 0']
    #allocation5 [shape = 's32[2]{0}', space=sflag, size = 0x8, scoped, tag = 'scoped memory for tpu_custom_call.1']
    %11 = vsyncpa [#allocation5], 0
    %s12 = scalar_lea.sflag [#allocation5], 1
    %13 = vsyncpa %s12, 0
    loop: start=0, step=1, limit=4
    $region2: #{tpu_custom_call.1} parent=1 // loop_pre_header
      _
    $region3: #{tpu_custom_call.1} parent=1 // loop_header
      %s15 = sphi 0, %s19
      %p16 = scmp.ge.s32.totalorder %s15, 4
      %s22 = sphi 0, %s34
      %s23 = sphi 0, %s30
      %s24 = sphi 0, %s22
      %s25 = sphi 0, %s23
      %s26 = sphi 0, %s24
      %s27 = sphi 0, %s25
      %s37 = sphi 0, %s39
      %s40 = sphi 0, %s37
      %s41 = sphi 0, %s40
      %s57 = sphi 0, %s41
      %s61 = sphi 0, %s61
      %s63 = sphi 0, %s61
      %s64 = sphi 0, %s63
      %s78 = sphi 0, %s64
      %s84 = sphi 0, %s86
      %s87 = sphi 0, %s84
      %s88 = sphi 0, %s87
      %s104 = sphi 0, %s88
      %s110 = sphi 0, %s112
      %s113 = sphi 0, %s110
      %s114 = sphi 0, %s113
      %s130 = sphi 0, %s114
      %s136 = sphi 0, %s138
      %s139 = sphi 0, %s136
      %s140 = sphi 0, %s139
      %s156 = sphi 0, %s140
      %s162 = sphi 0, %s164
      %s165 = sphi 0, %s162
      %s166 = sphi 0, %s165
      %s182 = sphi 0, %s166
      %s188 = sphi 0, %s190
      %s191 = sphi 0, %s188
      %s192 = sphi 0, %s191
      %s208 = sphi 0, %s192
    $region4: #{tpu_custom_call.1} parent=1 // loop_header_branch
      %18 = sbr.rel (%p16) target = $region8
    $region5: #{tpu_custom_call.1} parent=1 // loop_body
      %s20 = ssub.s32 %s15, 1
      %s21 = ssub.s32 %s15, 2
      %s28 = sadd.s32 1, %s23
      %p29 = scmp.ge.s32.totalorder %s28, 1
      %s30 = scalar_select %p29, 0, %s28
      %s31 = sadd.s32 1, %s22
      %s32 = scalar_select %p29, %s31, %s22
      %p33 = scmp.ge.s32.totalorder %s32, 2
      %s34 = scalar_select %p33, 0, %s32
      %s35 = ssub.s32 %s22, %s34
      %p36 = scmp.eq.s32.totalorder %s35, 0
      %s38 = sadd.s32 %s37, 1
      %s39 = scalar_select %p36, %s37, %s38
      %p42 = pneg %p36
      %p43 = scmp.eq.s32.totalorder %s15, 1
      %p44 = por %p42, %p43
      %p45 = scmp.ne.s32.totalorder %s37, %s40
      %p46 = scmp.eq.s32.totalorder %s15, 0
      %p47 = por %p45, %p46
      %p48 = scmp.ne.s32.totalorder %s37, %s40
      %p49 = scmp.eq.s32.totalorder %s20, 1
      %p50 = por %p48, %p49
      %p51 = scmp.ne.s32.totalorder %s40, %s41
      %p52 = scmp.eq.s32.totalorder %s20, 0
      %p53 = por %p51, %p52
      %p54 = scmp.ne.s32.totalorder %s40, %s41
      %p55 = scmp.eq.s32.totalorder %s21, 1
      %p56 = por %p54, %p55
      %p58 = scmp.ne.s32.totalorder %s41, %s57
      %p59 = scmp.eq.s32.totalorder %s21, 0
      %p60 = por %p58, %p59
      %s62 = sadd.s32 %s61, 1
      %p65 = scmp.eq.s32.totalorder %s15, 1
      %p66 = scmp.ne.s32.totalorder %s61, %s63
      %p67 = scmp.eq.s32.totalorder %s15, 0
      %p68 = por %p66, %p67
      %p69 = scmp.ne.s32.totalorder %s61, %s63
      %p70 = scmp.eq.s32.totalorder %s20, 1
      %p71 = por %p69, %p70
      %p72 = scmp.ne.s32.totalorder %s63, %s64
      %p73 = scmp.eq.s32.totalorder %s20, 0
      %p74 = por %p72, %p73
      %p75 = scmp.ne.s32.totalorder %s63, %s64
      %p76 = scmp.eq.s32.totalorder %s21, 1
      %p77 = por %p75, %p76
      %p79 = scmp.ne.s32.totalorder %s64, %s78
      %p80 = scmp.eq.s32.totalorder %s21, 0
      %p81 = por %p79, %p80
      %s82 = ssub.s32 %s22, %s34
      %p83 = scmp.eq.s32.totalorder %s82, 0
      %s85 = sadd.s32 %s84, 1
      %s86 = scalar_select %p83, %s84, %s85
      %p89 = pneg %p83
      %p90 = scmp.eq.s32.totalorder %s15, 1
      %p91 = por %p89, %p90
      %p92 = scmp.ne.s32.totalorder %s84, %s87
      %p93 = scmp.eq.s32.totalorder %s15, 0
      %p94 = por %p92, %p93
      %p95 = scmp.ne.s32.totalorder %s84, %s87
      %p96 = scmp.eq.s32.totalorder %s20, 1
      %p97 = por %p95, %p96
      %p98 = scmp.ne.s32.totalorder %s87, %s88
      %p99 = scmp.eq.s32.totalorder %s20, 0
      %p100 = por %p98, %p99
      %p101 = scmp.ne.s32.totalorder %s87, %s88
      %p102 = scmp.eq.s32.totalorder %s21, 1
      %p103 = por %p101, %p102
      %p105 = scmp.ne.s32.totalorder %s88, %s104
      %p106 = scmp.eq.s32.totalorder %s21, 0
      %p107 = por %p105, %p106
      %s108 = ssub.s32 %s23, %s30
      %p109 = scmp.eq.s32.totalorder %s108, 0
      %s111 = sadd.s32 %s110, 1
      %s112 = scalar_select %p109, %s110, %s111
      %p115 = pneg %p109
      %p116 = scmp.eq.s32.totalorder %s15, 1
      %p117 = por %p115, %p116
      %p118 = scmp.ne.s32.totalorder %s110, %s113
      %p119 = scmp.eq.s32.totalorder %s15, 0
      %p120 = por %p118, %p119
      %p121 = scmp.ne.s32.totalorder %s110, %s113
      %p122 = scmp.eq.s32.totalorder %s20, 1
      %p123 = por %p121, %p122
      %p124 = scmp.ne.s32.totalorder %s113, %s114
      %p125 = scmp.eq.s32.totalorder %s20, 0
      %p126 = por %p124, %p125
      %p127 = scmp.ne.s32.totalorder %s113, %s114
      %p128 = scmp.eq.s32.totalorder %s21, 1
      %p129 = por %p127, %p128
      %p131 = scmp.ne.s32.totalorder %s114, %s130
      %p132 = scmp.eq.s32.totalorder %s21, 0
      %p133 = por %p131, %p132
      %s134 = ssub.s32 %s22, %s34
      %p135 = scmp.eq.s32.totalorder %s134, 0
      %s137 = sadd.s32 %s136, 1
      %s138 = scalar_select %p135, %s136, %s137
      %p141 = pneg %p135
      %p142 = scmp.eq.s32.totalorder %s15, 1
      %p143 = por %p141, %p142
      %p144 = scmp.ne.s32.totalorder %s136, %s139
      %p145 = scmp.eq.s32.totalorder %s15, 0
      %p146 = por %p144, %p145
      %p147 = scmp.ne.s32.totalorder %s136, %s139
      %p148 = scmp.eq.s32.totalorder %s20, 1
      %p149 = por %p147, %p148
      %p150 = scmp.ne.s32.totalorder %s139, %s140
      %p151 = scmp.eq.s32.totalorder %s20, 0
      %p152 = por %p150, %p151
      %p153 = scmp.ne.s32.totalorder %s139, %s140
      %p154 = scmp.eq.s32.totalorder %s21, 1
      %p155 = por %p153, %p154
      %p157 = scmp.ne.s32.totalorder %s140, %s156
      %p158 = scmp.eq.s32.totalorder %s21, 0
      %p159 = por %p157, %p158
      %s160 = ssub.s32 %s23, %s30
      %p161 = scmp.eq.s32.totalorder %s160, 0
      %s163 = sadd.s32 %s162, 1
      %s164 = scalar_select %p161, %s162, %s163
      %p167 = pneg %p161
      %p168 = scmp.eq.s32.totalorder %s15, 1
      %p169 = por %p167, %p168
      %p170 = scmp.ne.s32.totalorder %s162, %s165
      %p171 = scmp.eq.s32.totalorder %s15, 0
      %p172 = por %p170, %p171
      %p173 = scmp.ne.s32.totalorder %s162, %s165
      %p174 = scmp.eq.s32.totalorder %s20, 1
      %p175 = por %p173, %p174
      %p176 = scmp.ne.s32.totalorder %s165, %s166
      %p177 = scmp.eq.s32.totalorder %s20, 0
      %p178 = por %p176, %p177
      %p179 = scmp.ne.s32.totalorder %s165, %s166
      %p180 = scmp.eq.s32.totalorder %s21, 1
      %p181 = por %p179, %p180
      %p183 = scmp.ne.s32.totalorder %s166, %s182
      %p184 = scmp.eq.s32.totalorder %s21, 0
      %p185 = por %p183, %p184
      %s186 = ssub.s32 %s22, %s34
      %p187 = scmp.eq.s32.totalorder %s186, 0
      %s189 = sadd.s32 %s188, 1
      %s190 = scalar_select %p187, %s188, %s189
      %p193 = pneg %p187
      %p194 = scmp.eq.s32.totalorder %s15, 1
      %p195 = por %p193, %p194
      %p196 = scmp.ne.s32.totalorder %s188, %s191
      %p197 = scmp.eq.s32.totalorder %s15, 0
      %p198 = por %p196, %p197
      %p199 = scmp.ne.s32.totalorder %s188, %s191
      %p200 = scmp.eq.s32.totalorder %s20, 1
      %p201 = por %p199, %p200
      %p202 = scmp.ne.s32.totalorder %s191, %s192
      %p203 = scmp.eq.s32.totalorder %s20, 0
      %p204 = por %p202, %p203
      %p205 = scmp.ne.s32.totalorder %s191, %s192
      %p206 = scmp.eq.s32.totalorder %s21, 1
      %p207 = por %p205, %p206
      %p209 = scmp.ne.s32.totalorder %s192, %s208
      %p210 = scmp.eq.s32.totalorder %s21, 0
      %p211 = por %p209, %p210
      %p212 = scmp.le.s32.totalorder 1, %s15
      %p213 = scmp.lt.s32.totalorder %s15, 3
      %p214 = pnand %p212, %p213
      %p215 = pneg %p214
      // Predicated region
      $region9: #{tpu_custom_call.1} parent=5 // pred_check
        _
      $region10: #{tpu_custom_call.1} parent=5 // pred_check_branch
        %217 = sbr.rel (%p214) target = $region12
      $region11: #{tpu_custom_call.1} parent=5 // pred_region
        %s218 = ssub.s32 %s15, 1
        // Predicated region
        $region13: #{tpu_custom_call.1} parent=11 // pred_check
          %p219 = pneg %p74
        $region14: #{tpu_custom_call.1} parent=11 // pred_check_branch
          %221 = sbr.rel (%p219) target = $region16
        $region15: #{tpu_custom_call.1} parent=11 // pred_region
          _
        $region16: #{tpu_custom_call.1} parent=11 // pred_fallthru
          _
        // Predicated region
        $region17: #{tpu_custom_call.1} parent=11 // pred_check
          %p222 = pneg %p126
        $region18: #{tpu_custom_call.1} parent=11 // pred_check_branch
          %224 = sbr.rel (%p222) target = $region20
        $region19: #{tpu_custom_call.1} parent=11 // pred_region
          %s225 = smul.u32 2, %s25
          %p226 = scmp.lt.s32.totalorder %s225, 1
          %s227 = scalar_select %p226, %s225, 1
          %s228 = scalar_lea.vmem %s3, %s227
          %s229 = smul.u32 2, %s25
        $region20: #{tpu_custom_call.1} parent=11 // pred_fallthru
          _
        // Predicated region
        $region21: #{tpu_custom_call.1} parent=11 // pred_check
          %p230 = pneg %p178
        $region22: #{tpu_custom_call.1} parent=11 // pred_check_branch
          %232 = sbr.rel (%p230) target = $region24
        $region23: #{tpu_custom_call.1} parent=11 // pred_region
          %s233 = smul.u32 2, %s25
          %p234 = scmp.lt.s32.totalorder %s233, 1
          %s235 = scalar_select %p234, %s233, 1
          %s236 = scalar_lea.vmem %s5, %s235
          %s237 = smul.u32 2, %s25
        $region24: #{tpu_custom_call.1} parent=11 // pred_fallthru
          _
      $region12: #{tpu_custom_call.1} parent=5 // pred_fallthru
        _
      %p238 = scmp.lt.s32.totalorder %s15, 2
      // Predicated region
      $region25: #{tpu_custom_call.1} parent=5 // pred_check
        %p239 = pneg %p238
      $region26: #{tpu_custom_call.1} parent=5 // pred_check_branch
        %241 = sbr.rel (%p239) target = $region28
      $region27: #{tpu_custom_call.1} parent=5 // pred_region
        // Predicated region
        $region29: #{tpu_custom_call.1} parent=27 // pred_check
          %p242 = pneg %p47
        $region30: #{tpu_custom_call.1} parent=27 // pred_check_branch
          %244 = sbr.rel (%p242) target = $region32
        $region31: #{tpu_custom_call.1} parent=27 // pred_region
          %s245 = smul.u32 16, %s22
          %p246 = scmp.lt.s32.totalorder %s245, 31
          %s247 = scalar_select %p246, %s245, 31
          %s248 = smul.addr %s247, 8
          %s249 = scalar_lea.vmem %s0, %s248
          %s250 = smul.u32 16, %s22
        $region32: #{tpu_custom_call.1} parent=27 // pred_fallthru
          _
        // Predicated region
        $region33: #{tpu_custom_call.1} parent=27 // pred_check
          %p251 = pneg %p94
        $region34: #{tpu_custom_call.1} parent=27 // pred_check_branch
          %253 = sbr.rel (%p251) target = $region36
        $region35: #{tpu_custom_call.1} parent=27 // pred_region
          %s254 = smul.u32 16, %s22
          %p255 = scmp.lt.s32.totalorder %s254, 31
          %s256 = scalar_select %p255, %s254, 31
          %s257 = smul.addr %s256, 8
          %s258 = scalar_lea.vmem %s2, %s257
          %s259 = smul.u32 16, %s22
        $region36: #{tpu_custom_call.1} parent=27 // pred_fallthru
          _
        // Predicated region
        $region37: #{tpu_custom_call.1} parent=27 // pred_check
          %p260 = pneg %p146
        $region38: #{tpu_custom_call.1} parent=27 // pred_check_branch
          %262 = sbr.rel (%p260) target = $region40
        $region39: #{tpu_custom_call.1} parent=27 // pred_region
          %s263 = smul.u32 16, %s22
          %p264 = scmp.lt.s32.totalorder %s263, 31
          %s265 = scalar_select %p264, %s263, 31
          %s266 = smul.addr %s265, 8
          %s267 = scalar_lea.vmem %s4, %s266
          %s268 = smul.u32 16, %s22
        $region40: #{tpu_custom_call.1} parent=27 // pred_fallthru
          _
      $region28: #{tpu_custom_call.1} parent=5 // pred_fallthru
        _
      %p269 = scmp.le.s32.totalorder 1, %s15
      %p270 = scmp.lt.s32.totalorder %s15, 3
      %p271 = pnand %p269, %p270
      %p272 = pneg %p271
      // Predicated region
      $region41: #{tpu_custom_call.1} parent=5 // pred_check
        _
      $region42: #{tpu_custom_call.1} parent=5 // pred_check_branch
        %274 = sbr.rel (%p271) target = $region44
      $region43: #{tpu_custom_call.1} parent=5 // pred_region
        %s275 = ssub.s32 %s15, 1
        %s276 = smul.u32 16, %s24
        %p277 = scmp.lt.s32.totalorder %s276, 31
        %s278 = scalar_select %p277, %s276, 31
        %s279 = smul.addr %s278, 8
        %s280 = scalar_lea.vmem %s0, %s279
        %p281 = pneg %p53
        %p282 = pneg %p50
        %p283 = pneg %p74
        %p284 = pneg %p71
        %s285 = smul.u32 16, %s24
        %p286 = scmp.lt.s32.totalorder %s285, 31
        %s287 = scalar_select %p286, %s285, 31
        %s288 = smul.addr %s287, 8
        %s289 = scalar_lea.vmem %s2, %s288
        %p290 = pneg %p100
        %p291 = pneg %p97
        %s292 = smul.u32 2, %s25
        %p293 = scmp.lt.s32.totalorder %s292, 1
        %s294 = scalar_select %p293, %s292, 1
        %s295 = scalar_lea.vmem %s3, %s294
        %p296 = pneg %p126
        %p297 = pneg %p123
        %s298 = smul.u32 16, %s24
        %p299 = scmp.lt.s32.totalorder %s298, 31
        %s300 = scalar_select %p299, %s298, 31
        %s301 = smul.addr %s300, 8
        %s302 = scalar_lea.vmem %s4, %s301
        %p303 = pneg %p152
        %p304 = pneg %p149
        %s305 = smul.u32 2, %s25
        %p306 = scmp.lt.s32.totalorder %s305, 1
        %s307 = scalar_select %p306, %s305, 1
        %s308 = scalar_lea.vmem %s5, %s307
        %p309 = pneg %p178
        %p310 = pneg %p175
        %p311 = pneg %p204
        %p312 = pneg %p201
        %s313 = sand.u32 %s191, 1
        %s314 = scalar_lea.sflag [#allocation5], %s313
        %s315 = sand.u32 %s191, 1
        %s316 = smul.addr %s315, 128
        %s317 = scalar_lea.vmem [#allocation4], %s316
        %s318 = smul.u32 16, %s24
        %p319 = scmp.lt.s32.totalorder %s318, 31
        %s320 = scalar_select %p319, %s318, 31
        %s321 = smul.addr %s320, 8
        %s322 = scalar_lea.vmem %s0, %s321
        %s323 = smul.u32 16, %s24
        %s324 = smul.u32 16, %s24
        %p325 = scmp.lt.s32.totalorder %s324, 31
        %s326 = scalar_select %p325, %s324, 31
        %s327 = smul.addr %s326, 8
        %s328 = scalar_lea.vmem %s2, %s327
        %s329 = smul.u32 16, %s24
        %s330 = smul.u32 2, %s25
        %p331 = scmp.lt.s32.totalorder %s330, 1
        %s332 = scalar_select %p331, %s330, 1
        %s333 = scalar_lea.vmem %s3, %s332
        %s334 = smul.u32 2, %s25
        %s335 = smul.u32 16, %s24
        %p336 = scmp.lt.s32.totalorder %s335, 31
        %s337 = scalar_select %p336, %s335, 31
        %s338 = smul.addr %s337, 8
        %s339 = scalar_lea.vmem %s4, %s338
        %s340 = smul.u32 16, %s24
        %s341 = smul.u32 2, %s25
        %p342 = scmp.lt.s32.totalorder %s341, 1
        %s343 = scalar_select %p342, %s341, 1
        %s344 = scalar_lea.vmem %s5, %s343
        %s345 = smul.u32 2, %s25
        %s346 = smul.u32 16, %s24
        %p347 = scmp.eq.s32.totalorder %s25, 0
        // Predicated region
        $region45: #{tpu_custom_call.1} parent=43 // pred_check
          %p348 = pneg %p347
        $region46: #{tpu_custom_call.1} parent=43 // pred_check_branch
          %350 = sbr.rel (%p348) target = $region48
        $region47: #{tpu_custom_call.1} parent=43 // pred_region
          %351 = vst [vmem:[#allocation2] sm:$0xff] -inf
          %352 = vst [vmem:[#allocation2 + $0x8] sm:$0xff] -inf
          %353 = vst [vmem:[#allocation2 + $0x10] sm:$0xff] -inf
          %354 = vst [vmem:[#allocation2 + $0x18] sm:$0xff] -inf
          %355 = vst [vmem:[#allocation2 + $0x20] sm:$0xff] -inf
          %356 = vst [vmem:[#allocation2 + $0x28] sm:$0xff] -inf
          %357 = vst [vmem:[#allocation2 + $0x30] sm:$0xff] -inf
          %358 = vst [vmem:[#allocation2 + $0x38] sm:$0xff] -inf
          %359 = vst [vmem:[#allocation2 + $0x40] sm:$0xff] -inf
          %360 = vst [vmem:[#allocation2 + $0x48] sm:$0xff] -inf
          %361 = vst [vmem:[#allocation2 + $0x50] sm:$0xff] -inf
          %362 = vst [vmem:[#allocation2 + $0x58] sm:$0xff] -inf
          %363 = vst [vmem:[#allocation2 + $0x60] sm:$0xff] -inf
          %364 = vst [vmem:[#allocation2 + $0x68] sm:$0xff] -inf
          %365 = vst [vmem:[#allocation2 + $0x70] sm:$0xff] -inf
          %366 = vst [vmem:[#allocation2 + $0x78] sm:$0xff] -inf
          %367 = vst [vmem:[#allocation3] sm:$0xff] inf
          %368 = vst [vmem:[#allocation3 + $0x8] sm:$0xff] inf
          %369 = vst [vmem:[#allocation3 + $0x10] sm:$0xff] inf
          %370 = vst [vmem:[#allocation3 + $0x18] sm:$0xff] inf
          %371 = vst [vmem:[#allocation3 + $0x20] sm:$0xff] inf
          %372 = vst [vmem:[#allocation3 + $0x28] sm:$0xff] inf
          %373 = vst [vmem:[#allocation3 + $0x30] sm:$0xff] inf
          %374 = vst [vmem:[#allocation3 + $0x38] sm:$0xff] inf
          %375 = vst [vmem:[#allocation3 + $0x40] sm:$0xff] inf
          %376 = vst [vmem:[#allocation3 + $0x48] sm:$0xff] inf
          %377 = vst [vmem:[#allocation3 + $0x50] sm:$0xff] inf
          %378 = vst [vmem:[#allocation3 + $0x58] sm:$0xff] inf
          %379 = vst [vmem:[#allocation3 + $0x60] sm:$0xff] inf
          %380 = vst [vmem:[#allocation3 + $0x68] sm:$0xff] inf
          %381 = vst [vmem:[#allocation3 + $0x70] sm:$0xff] inf
          %382 = vst [vmem:[#allocation3 + $0x78] sm:$0xff] inf
        $region48: #{tpu_custom_call.1} parent=43 // pred_fallthru
          _
        %s383 = smul.u32 %s25, 256
        %s384 = scalar_lea.vmem %s1, %s383
        %v385 = vld [vmem:[%s384] sm:$0xff]
        %v386 = vld [vmem:[%s384 + $0x8] sm:$0xff]
        %v387 = vld [vmem:[%s384 + $0x10] sm:$0xff]
        %v388 = vld [vmem:[%s384 + $0x18] sm:$0xff]
        %v389 = vld [vmem:[%s384 + $0x20] sm:$0xff]
        %v390 = vld [vmem:[%s384 + $0x28] sm:$0xff]
        %v391 = vld [vmem:[%s384 + $0x30] sm:$0xff]
        %v392 = vld [vmem:[%s384 + $0x38] sm:$0xff]
        %v393 = vld [vmem:[%s384 + $0x40] sm:$0xff]
        %v394 = vld [vmem:[%s384 + $0x48] sm:$0xff]
        %v395 = vld [vmem:[%s384 + $0x50] sm:$0xff]
        %v396 = vld [vmem:[%s384 + $0x58] sm:$0xff]
        %v397 = vld [vmem:[%s384 + $0x60] sm:$0xff]
        %v398 = vld [vmem:[%s384 + $0x68] sm:$0xff]
        %v399 = vld [vmem:[%s384 + $0x70] sm:$0xff]
        %v400 = vld [vmem:[%s384 + $0x78] sm:$0xff]
        %v401 = vld [vmem:[%s384 + $0x80] sm:$0xff]
        %v402 = vld [vmem:[%s384 + $0x88] sm:$0xff]
        %v403 = vld [vmem:[%s384 + $0x90] sm:$0xff]
        %v404 = vld [vmem:[%s384 + $0x98] sm:$0xff]
        %v405 = vld [vmem:[%s384 + $0xa0] sm:$0xff]
        %v406 = vld [vmem:[%s384 + $0xa8] sm:$0xff]
        %v407 = vld [vmem:[%s384 + $0xb0] sm:$0xff]
        %v408 = vld [vmem:[%s384 + $0xb8] sm:$0xff]
        %v409 = vld [vmem:[%s384 + $0xc0] sm:$0xff]
        %v410 = vld [vmem:[%s384 + $0xc8] sm:$0xff]
        %v411 = vld [vmem:[%s384 + $0xd0] sm:$0xff]
        %v412 = vld [vmem:[%s384 + $0xd8] sm:$0xff]
        %v413 = vld [vmem:[%s384 + $0xe0] sm:$0xff]
        %v414 = vld [vmem:[%s384 + $0xe8] sm:$0xff]
        %v415 = vld [vmem:[%s384 + $0xf0] sm:$0xff]
        %v416 = vld [vmem:[%s384 + $0xf8] sm:$0xff]
        %v417 = vld [vmem:[%s322] sm:$0xff]
        %v418 = vld [vmem:[%s322 + $0x8] sm:$0xff]
        %v419 = vld [vmem:[%s322 + $0x10] sm:$0xff]
        %v420 = vld [vmem:[%s322 + $0x18] sm:$0xff]
        %v421 = vld [vmem:[%s322 + $0x20] sm:$0xff]
        %v422 = vld [vmem:[%s322 + $0x28] sm:$0xff]
        %v423 = vld [vmem:[%s322 + $0x30] sm:$0xff]
        %v424 = vld [vmem:[%s322 + $0x38] sm:$0xff]
        %v425 = vld [vmem:[%s322 + $0x40] sm:$0xff]
        %v426 = vld [vmem:[%s322 + $0x48] sm:$0xff]
        %v427 = vld [vmem:[%s322 + $0x50] sm:$0xff]
        %v428 = vld [vmem:[%s322 + $0x58] sm:$0xff]
        %v429 = vld [vmem:[%s322 + $0x60] sm:$0xff]
        %v430 = vld [vmem:[%s322 + $0x68] sm:$0xff]
        %v431 = vld [vmem:[%s322 + $0x70] sm:$0xff]
        %v432 = vld [vmem:[%s322 + $0x78] sm:$0xff]
        %vm433 = vcmask 523264
        %v435 = vsel %vm433, %v417, 0
        %v438 = vsel %vm433, %v418, 0
        %v441 = vsel %vm433, %v419, 0
        %v444 = vsel %vm433, %v420, 0
        %v447 = vsel %vm433, %v421, 0
        %v450 = vsel %vm433, %v422, 0
        %v453 = vsel %vm433, %v423, 0
        %v456 = vsel %vm433, %v424, 0
        %v459 = vsel %vm433, %v425, 0
        %v462 = vsel %vm433, %v426, 0
        %v465 = vsel %vm433, %v427, 0
        %v468 = vsel %vm433, %v428, 0
        %v471 = vsel %vm433, %v429, 0
        %v474 = vsel %vm433, %v430, 0
        %v477 = vsel %vm433, %v431, 0
        %v480 = vsel %vm433, %v432, 0
        %v483 = vsel %vm433, %v385, 0
        %v486 = vsel %vm433, %v386, 0
        %v489 = vsel %vm433, %v387, 0
        %v492 = vsel %vm433, %v388, 0
        %v495 = vsel %vm433, %v389, 0
        %v498 = vsel %vm433, %v390, 0
        %v501 = vsel %vm433, %v391, 0
        %v504 = vsel %vm433, %v392, 0
        %v507 = vsel %vm433, %v393, 0
        %v510 = vsel %vm433, %v394, 0
        %v513 = vsel %vm433, %v395, 0
        %v516 = vsel %vm433, %v396, 0
        %v519 = vsel %vm433, %v397, 0
        %v522 = vsel %vm433, %v398, 0
        %v525 = vsel %vm433, %v399, 0
        %v528 = vsel %vm433, %v400, 0
        %v531 = vsel %vm433, %v401, 0
        %v534 = vsel %vm433, %v402, 0
        %v537 = vsel %vm433, %v403, 0
        %v540 = vsel %vm433, %v404, 0
        %v543 = vsel %vm433, %v405, 0
        %v546 = vsel %vm433, %v406, 0
        %v549 = vsel %vm433, %v407, 0
        %v552 = vsel %vm433, %v408, 0
        %v555 = vsel %vm433, %v409, 0
        %v558 = vsel %vm433, %v410, 0
        %v561 = vsel %vm433, %v411, 0
        %v564 = vsel %vm433, %v412, 0
        %v567 = vsel %vm433, %v413, 0
        %v570 = vsel %vm433, %v414, 0
        %v573 = vsel %vm433, %v415, 0
        %v576 = vsel %vm433, %v416, 0
        %578 = vmatprep.subr.mxu0 0.0
        %579 = vmatpush1.xpose.msra.mxu0 %v483
        %580 = vmatprep.subr.mxu0 0.0
        %581 = vmatpush1.xpose.msra.mxu0 %v486
        %582 = vmatprep.subr.mxu0 0.0
        %583 = vmatpush1.xpose.msra.mxu0 %v489
        %584 = vmatprep.subr.mxu0 0.0
        %585 = vmatpush1.xpose.msra.mxu0 %v492
        %586 = vmatprep.subr.mxu0 0.0
        %587 = vmatpush1.xpose.msra.mxu0 %v495
        %588 = vmatprep.subr.mxu0 0.0
        %589 = vmatpush1.xpose.msra.mxu0 %v498
        %590 = vmatprep.subr.mxu0 0.0
        %591 = vmatpush1.xpose.msra.mxu0 %v501
        %592 = vmatprep.subr.mxu0 0.0
        %593 = vmatpush1.xpose.msra.mxu0 %v504
        %594 = vmatprep.subr.mxu0 0.0
        %595 = vmatpush1.xpose.msra.mxu0 %v507
        %596 = vmatprep.subr.mxu0 0.0
        %597 = vmatpush1.xpose.msra.mxu0 %v510
        %598 = vmatprep.subr.mxu0 0.0
        %599 = vmatpush1.xpose.msra.mxu0 %v513
        %600 = vmatprep.subr.mxu0 0.0
        %601 = vmatpush1.xpose.msra.mxu0 %v516
        %602 = vmatprep.subr.mxu0 0.0
        %603 = vmatpush1.xpose.msra.mxu0 %v519
        %604 = vmatprep.subr.mxu0 0.0
        %605 = vmatpush1.xpose.msra.mxu0 %v522
        %606 = vmatprep.subr.mxu0 0.0
        %607 = vmatpush1.xpose.msra.mxu0 %v525
        %608 = vmatprep.subr.mxu0 0.0
        %609 = vmatpush1.xpose.msra.mxu0 %v528
        %610 = vmatprep.subr.mxu0 0.0
        %611 = vmatpush1.xpose.msra.mxu0 %v531
        %612 = vmatprep.subr.mxu0 0.0
        %613 = vmatpush1.xpose.msra.mxu0 %v534
        %614 = vmatprep.subr.mxu0 0.0
        %615 = vmatpush1.xpose.msra.mxu0 %v537
        %616 = vmatprep.subr.mxu0 0.0
        %617 = vmatpush1.xpose.msra.mxu0 %v540
        %618 = vmatprep.subr.mxu0 0.0
        %619 = vmatpush1.xpose.msra.mxu0 %v543
        %620 = vmatprep.subr.mxu0 0.0
        %621 = vmatpush1.xpose.msra.mxu0 %v546
        %622 = vmatprep.subr.mxu0 0.0
        %623 = vmatpush1.xpose.msra.mxu0 %v549
        %624 = vmatprep.subr.mxu0 0.0
        %625 = vmatpush1.xpose.msra.mxu0 %v552
        %626 = vmatprep.subr.mxu0 0.0
        %627 = vmatpush1.xpose.msra.mxu0 %v555
        %628 = vmatprep.subr.mxu0 0.0
        %629 = vmatpush1.xpose.msra.mxu0 %v558
        %630 = vmatprep.subr.mxu0 0.0
        %631 = vmatpush1.xpose.msra.mxu0 %v561
        %632 = vmatprep.subr.mxu0 0.0
        %633 = vmatpush1.xpose.msra.mxu0 %v564
        %634 = vmatprep.subr.mxu0 0.0
        %635 = vmatpush1.xpose.msra.mxu0 %v567
        %636 = vmatprep.subr.mxu0 0.0
        %637 = vmatpush1.xpose.msra.mxu0 %v570
        %638 = vmatprep.subr.mxu0 0.0
        %639 = vmatpush1.xpose.msra.mxu0 %v573
        %640 = vmatprep.subr.mxu0 0.0
        %641 = vmatpush1.xpose.msra.mxu0 %v576
        %642 = vmatprep.mubr.f32.mxu0 0.0
        %643 = vmatmul.mubr.f32.gmra.mrb[0].mxu0 %v435
        %v644 = vpop.f32.mrb[0].mxu0
        %v645 = vadd.f32 0.0, %v644
        %v646 = vpop.f32.mrb[0].mxu0
        %v647 = vadd.f32 0.0, %v646
        %648 = vmatprep.mubr.f32.mxu0 0.0
        %649 = vmatmul.mubr.f32.gmra.mrb[0].mxu0 %v438
        %v650 = vpop.f32.mrb[0].mxu0
        %v651 = vadd.f32 0.0, %v650
        %v652 = vpop.f32.mrb[0].mxu0
        %v653 = vadd.f32 0.0, %v652
        %654 = vmatprep.mubr.f32.mxu0 0.0
        %655 = vmatmul.mubr.f32.gmra.mrb[0].mxu0 %v441
        %v656 = vpop.f32.mrb[0].mxu0
        %v657 = vadd.f32 0.0, %v656
        %v658 = vpop.f32.mrb[0].mxu0
        %v659 = vadd.f32 0.0, %v658
        %660 = vmatprep.mubr.f32.mxu0 0.0
        %661 = vmatmul.mubr.f32.gmra.mrb[0].mxu0 %v444
        %v662 = vpop.f32.mrb[0].mxu0
        %v663 = vadd.f32 0.0, %v662
        %v664 = vpop.f32.mrb[0].mxu0
        %v665 = vadd.f32 0.0, %v664
        %666 = vmatprep.mubr.f32.mxu0 0.0
        %667 = vmatmul.mubr.f32.gmra.mrb[0].mxu0 %v447
        %v668 = vpop.f32.mrb[0].mxu0
        %v669 = vadd.f32 0.0, %v668
        %v670 = vpop.f32.mrb[0].mxu0
        %v671 = vadd.f32 0.0, %v670
        %672 = vmatprep.mubr.f32.mxu0 0.0
        %673 = vmatmul.mubr.f32.gmra.mrb[0].mxu0 %v450
        %v674 = vpop.f32.mrb[0].mxu0
        %v675 = vadd.f32 0.0, %v674
        %v676 = vpop.f32.mrb[0].mxu0
        %v677 = vadd.f32 0.0, %v676
        %678 = vmatprep.mubr.f32.mxu0 0.0
        %679 = vmatmul.mubr.f32.gmra.mrb[0].mxu0 %v453
        %v680 = vpop.f32.mrb[0].mxu0
        %v681 = vadd.f32 0.0, %v680
        %v682 = vpop.f32.mrb[0].mxu0
        %v683 = vadd.f32 0.0, %v682
        %684 = vmatprep.mubr.f32.mxu0 0.0
        %685 = vmatmul.mubr.f32.gmra.mrb[0].mxu0 %v456
        %v686 = vpop.f32.mrb[0].mxu0
        %v687 = vadd.f32 0.0, %v686
        %v688 = vpop.f32.mrb[0].mxu0
        %v689 = vadd.f32 0.0, %v688
        %690 = vmatprep.mubr.f32.mxu0 0.0
        %691 = vmatmul.mubr.f32.gmra.mrb[0].mxu0 %v459
        %v692 = vpop.f32.mrb[0].mxu0
        %v693 = vadd.f32 0.0, %v692
        %v694 = vpop.f32.mrb[0].mxu0
        %v695 = vadd.f32 0.0, %v694
        %696 = vmatprep.mubr.f32.mxu0 0.0
        %697 = vmatmul.mubr.f32.gmra.mrb[0].mxu0 %v462
        %v698 = vpop.f32.mrb[0].mxu0
        %v699 = vadd.f32 0.0, %v698
        %v700 = vpop.f32.mrb[0].mxu0
        %v701 = vadd.f32 0.0, %v700
        %702 = vmatprep.mubr.f32.mxu0 0.0
        %703 = vmatmul.mubr.f32.gmra.mrb[0].mxu0 %v465
        %v704 = vpop.f32.mrb[0].mxu0
        %v705 = vadd.f32 0.0, %v704
        %v706 = vpop.f32.mrb[0].mxu0
        %v707 = vadd.f32 0.0, %v706
        %708 = vmatprep.mubr.f32.mxu0 0.0
        %709 = vmatmul.mubr.f32.gmra.mrb[0].mxu0 %v468
        %v710 = vpop.f32.mrb[0].mxu0
        %v711 = vadd.f32 0.0, %v710
        %v712 = vpop.f32.mrb[0].mxu0
        %v713 = vadd.f32 0.0, %v712
        %714 = vmatprep.mubr.f32.mxu0 0.0
        %715 = vmatmul.mubr.f32.gmra.mrb[0].mxu0 %v471
        %v716 = vpop.f32.mrb[0].mxu0
        %v717 = vadd.f32 0.0, %v716
        %v718 = vpop.f32.mrb[0].mxu0
        %v719 = vadd.f32 0.0, %v718
        %720 = vmatprep.mubr.f32.mxu0 0.0
        %721 = vmatmul.mubr.f32.gmra.mrb[0].mxu0 %v474
        %v722 = vpop.f32.mrb[0].mxu0
        %v723 = vadd.f32 0.0, %v722
        %v724 = vpop.f32.mrb[0].mxu0
        %v725 = vadd.f32 0.0, %v724
        %726 = vmatprep.mubr.f32.mxu0 0.0
        %727 = vmatmul.mubr.f32.gmra.mrb[0].mxu0 %v477
        %v728 = vpop.f32.mrb[0].mxu0
        %v729 = vadd.f32 0.0, %v728
        %v730 = vpop.f32.mrb[0].mxu0
        %v731 = vadd.f32 0.0, %v730
        %732 = vmatprep.mubr.f32.mxu0 0.0
        %733 = vmatmul.mubr.f32.gmra.mrb[0].mxu0 %v480
        %v734 = vpop.f32.mrb[0].mxu0
        %v735 = vadd.f32 0.0, %v734
        %v736 = vpop.f32.mrb[0].mxu0
        %v737 = vadd.f32 0.0, %v736
        %738 = vdwg.mxu0
        %v739 = vld [vmem:[%s344] sm:$0x3]
        %v741 = vlaneseq
        %v742 = vshrl.u32 %v741, 7
        %v743 = vsub.s32 0, %v742
        %v744 = vrot.slane %v739, %v743
        %v745 = vlaneseq
        %v746 = vshrl.u32 %v745, 7
        %v747 = vsub.s32 1, %v746
        %v748 = vrot.slane %v739, %v747
        %v751 = vsub.f32 %v744, %v645
        %v752 = vsub.f32 %v748, %v647
        %v753 = vsub.f32 %v744, %v651
        %v754 = vsub.f32 %v748, %v653
        %v755 = vsub.f32 %v744, %v657
        %v756 = vsub.f32 %v748, %v659
        %v757 = vsub.f32 %v744, %v663
        %v758 = vsub.f32 %v748, %v665
        %v759 = vsub.f32 %v744, %v669
        %v760 = vsub.f32 %v748, %v671
        %v761 = vsub.f32 %v744, %v675
        %v762 = vsub.f32 %v748, %v677
        %v763 = vsub.f32 %v744, %v681
        %v764 = vsub.f32 %v748, %v683
        %v765 = vsub.f32 %v744, %v687
        %v766 = vsub.f32 %v748, %v689
        %v767 = vsub.f32 %v744, %v693
        %v768 = vsub.f32 %v748, %v695
        %v769 = vsub.f32 %v744, %v699
        %v770 = vsub.f32 %v748, %v701
        %v771 = vsub.f32 %v744, %v705
        %v772 = vsub.f32 %v748, %v707
        %v773 = vsub.f32 %v744, %v711
        %v774 = vsub.f32 %v748, %v713
        %v775 = vsub.f32 %v744, %v717
        %v776 = vsub.f32 %v748, %v719
        %v777 = vsub.f32 %v744, %v723
        %v778 = vsub.f32 %v748, %v725
        %v779 = vsub.f32 %v744, %v729
        %v780 = vsub.f32 %v748, %v731
        %v781 = vsub.f32 %v744, %v735
        %v782 = vsub.f32 %v748, %v737
        %v783 = vld [vmem:[%s328] sm:$0xff]
        %v784 = vld [vmem:[%s328 + $0x8] sm:$0xff]
        %v785 = vld [vmem:[%s328 + $0x10] sm:$0xff]
        %v786 = vld [vmem:[%s328 + $0x18] sm:$0xff]
        %v787 = vld [vmem:[%s328 + $0x20] sm:$0xff]
        %v788 = vld [vmem:[%s328 + $0x28] sm:$0xff]
        %v789 = vld [vmem:[%s328 + $0x30] sm:$0xff]
        %v790 = vld [vmem:[%s328 + $0x38] sm:$0xff]
        %v791 = vld [vmem:[%s328 + $0x40] sm:$0xff]
        %v792 = vld [vmem:[%s328 + $0x48] sm:$0xff]
        %v793 = vld [vmem:[%s328 + $0x50] sm:$0xff]
        %v794 = vld [vmem:[%s328 + $0x58] sm:$0xff]
        %v795 = vld [vmem:[%s328 + $0x60] sm:$0xff]
        %v796 = vld [vmem:[%s328 + $0x68] sm:$0xff]
        %v797 = vld [vmem:[%s328 + $0x70] sm:$0xff]
        %v798 = vld [vmem:[%s328 + $0x78] sm:$0xff]
        %v799 = vld [vmem:[%s333] sm:$0x3]
        %800 = vset.pattern.permute.xlu0 0
        %801 = vperm.xlu0 %800, %v783
        %v802 = vpop.permute.xlu0 %801
        %803 = vset.pattern.permute.xlu0 0
        %804 = vperm.xlu0 %803, %v784
        %v805 = vpop.permute.xlu0 %804
        %806 = vset.pattern.permute.xlu0 0
        %807 = vperm.xlu0 %806, %v785
        %v808 = vpop.permute.xlu0 %807
        %809 = vset.pattern.permute.xlu0 0
        %810 = vperm.xlu0 %809, %v786
        %v811 = vpop.permute.xlu0 %810
        %812 = vset.pattern.permute.xlu0 0
        %813 = vperm.xlu0 %812, %v787
        %v814 = vpop.permute.xlu0 %813
        %815 = vset.pattern.permute.xlu0 0
        %816 = vperm.xlu0 %815, %v788
        %v817 = vpop.permute.xlu0 %816
        %818 = vset.pattern.permute.xlu0 0
        %819 = vperm.xlu0 %818, %v789
        %v820 = vpop.permute.xlu0 %819
        %821 = vset.pattern.permute.xlu0 0
        %822 = vperm.xlu0 %821, %v790
        %v823 = vpop.permute.xlu0 %822
        %824 = vset.pattern.permute.xlu0 0
        %825 = vperm.xlu0 %824, %v791
        %v826 = vpop.permute.xlu0 %825
        %827 = vset.pattern.permute.xlu0 0
        %828 = vperm.xlu0 %827, %v792
        %v829 = vpop.permute.xlu0 %828
        %830 = vset.pattern.permute.xlu0 0
        %831 = vperm.xlu0 %830, %v793
        %v832 = vpop.permute.xlu0 %831
        %833 = vset.pattern.permute.xlu0 0
        %834 = vperm.xlu0 %833, %v794
        %v835 = vpop.permute.xlu0 %834
        %836 = vset.pattern.permute.xlu0 0
        %837 = vperm.xlu0 %836, %v795
        %v838 = vpop.permute.xlu0 %837
        %839 = vset.pattern.permute.xlu0 0
        %840 = vperm.xlu0 %839, %v796
        %v841 = vpop.permute.xlu0 %840
        %842 = vset.pattern.permute.xlu0 0
        %843 = vperm.xlu0 %842, %v797
        %v844 = vpop.permute.xlu0 %843
        %845 = vset.pattern.permute.xlu0 0
        %846 = vperm.xlu0 %845, %v798
        %v847 = vpop.permute.xlu0 %846
        %v848 = vlaneseq
        %v849 = vshrl.u32 %v848, 7
        %v850 = vsub.s32 0, %v849
        %v851 = vrot.slane %v799, %v850
        %v852 = vlaneseq
        %v853 = vshrl.u32 %v852, 7
        %v854 = vsub.s32 1, %v853
        %v855 = vrot.slane %v799, %v854
        %vm856 = vcmp.eq.s32.totalorder %v802, %v851
        %vm857 = vcmp.eq.s32.totalorder %v802, %v855
        %vm858 = vcmp.eq.s32.totalorder %v805, %v851
        %vm859 = vcmp.eq.s32.totalorder %v805, %v855
        %vm860 = vcmp.eq.s32.totalorder %v808, %v851
        %vm861 = vcmp.eq.s32.totalorder %v808, %v855
        %vm862 = vcmp.eq.s32.totalorder %v811, %v851
        %vm863 = vcmp.eq.s32.totalorder %v811, %v855
        %vm864 = vcmp.eq.s32.totalorder %v814, %v851
        %vm865 = vcmp.eq.s32.totalorder %v814, %v855
        %vm866 = vcmp.eq.s32.totalorder %v817, %v851
        %vm867 = vcmp.eq.s32.totalorder %v817, %v855
        %vm868 = vcmp.eq.s32.totalorder %v820, %v851
        %vm869 = vcmp.eq.s32.totalorder %v820, %v855
        %vm870 = vcmp.eq.s32.totalorder %v823, %v851
        %vm871 = vcmp.eq.s32.totalorder %v823, %v855
        %vm872 = vcmp.eq.s32.totalorder %v826, %v851
        %vm873 = vcmp.eq.s32.totalorder %v826, %v855
        %vm874 = vcmp.eq.s32.totalorder %v829, %v851
        %vm875 = vcmp.eq.s32.totalorder %v829, %v855
        %vm876 = vcmp.eq.s32.totalorder %v832, %v851
        %vm877 = vcmp.eq.s32.totalorder %v832, %v855
        %vm878 = vcmp.eq.s32.totalorder %v835, %v851
        %vm879 = vcmp.eq.s32.totalorder %v835, %v855
        %vm880 = vcmp.eq.s32.totalorder %v838, %v851
        %vm881 = vcmp.eq.s32.totalorder %v838, %v855
        %vm882 = vcmp.eq.s32.totalorder %v841, %v851
        %vm883 = vcmp.eq.s32.totalorder %v841, %v855
        %vm884 = vcmp.eq.s32.totalorder %v844, %v851
        %vm885 = vcmp.eq.s32.totalorder %v844, %v855
        %vm886 = vcmp.eq.s32.totalorder %v847, %v851
        %vm887 = vcmp.eq.s32.totalorder %v847, %v855
        %v888 = vld [vmem:[#allocation2] sm:$0xff]
        %v889 = vld [vmem:[#allocation2 + $0x8] sm:$0xff]
        %v890 = vld [vmem:[#allocation2 + $0x10] sm:$0xff]
        %v891 = vld [vmem:[#allocation2 + $0x18] sm:$0xff]
        %v892 = vld [vmem:[#allocation2 + $0x20] sm:$0xff]
        %v893 = vld [vmem:[#allocation2 + $0x28] sm:$0xff]
        %v894 = vld [vmem:[#allocation2 + $0x30] sm:$0xff]
        %v895 = vld [vmem:[#allocation2 + $0x38] sm:$0xff]
        %v896 = vld [vmem:[#allocation2 + $0x40] sm:$0xff]
        %v897 = vld [vmem:[#allocation2 + $0x48] sm:$0xff]
        %v898 = vld [vmem:[#allocation2 + $0x50] sm:$0xff]
        %v899 = vld [vmem:[#allocation2 + $0x58] sm:$0xff]
        %v900 = vld [vmem:[#allocation2 + $0x60] sm:$0xff]
        %v901 = vld [vmem:[#allocation2 + $0x68] sm:$0xff]
        %v902 = vld [vmem:[#allocation2 + $0x70] sm:$0xff]
        %v903 = vld [vmem:[#allocation2 + $0x78] sm:$0xff]
        %v904 = vld [vmem:[#allocation3] sm:$0xff]
        %v905 = vld [vmem:[#allocation3 + $0x8] sm:$0xff]
        %v906 = vld [vmem:[#allocation3 + $0x10] sm:$0xff]
        %v907 = vld [vmem:[#allocation3 + $0x18] sm:$0xff]
        %v908 = vld [vmem:[#allocation3 + $0x20] sm:$0xff]
        %v909 = vld [vmem:[#allocation3 + $0x28] sm:$0xff]
        %v910 = vld [vmem:[#allocation3 + $0x30] sm:$0xff]
        %v911 = vld [vmem:[#allocation3 + $0x38] sm:$0xff]
        %v912 = vld [vmem:[#allocation3 + $0x40] sm:$0xff]
        %v913 = vld [vmem:[#allocation3 + $0x48] sm:$0xff]
        %v914 = vld [vmem:[#allocation3 + $0x50] sm:$0xff]
        %v915 = vld [vmem:[#allocation3 + $0x58] sm:$0xff]
        %v916 = vld [vmem:[#allocation3 + $0x60] sm:$0xff]
        %v917 = vld [vmem:[#allocation3 + $0x68] sm:$0xff]
        %v918 = vld [vmem:[#allocation3 + $0x70] sm:$0xff]
        %v919 = vld [vmem:[#allocation3 + $0x78] sm:$0xff]
        %v920 = vsel %vm856, %v751, -inf
        %v921 = vsel %vm858, %v753, -inf
        %v922 = vsel %vm860, %v755, -inf
        %v923 = vsel %vm862, %v757, -inf
        %v924 = vsel %vm864, %v759, -inf
        %v925 = vsel %vm866, %v761, -inf
        %v926 = vsel %vm868, %v763, -inf
        %v927 = vsel %vm870, %v765, -inf
        %v928 = vsel %vm872, %v767, -inf
        %v929 = vsel %vm874, %v769, -inf
        %v930 = vsel %vm876, %v771, -inf
        %v931 = vsel %vm878, %v773, -inf
        %v932 = vsel %vm880, %v775, -inf
        %v933 = vsel %vm882, %v777, -inf
        %v934 = vsel %vm884, %v779, -inf
        %v935 = vsel %vm886, %v781, -inf
        %v936 = vmax.f32 %v888, %v920
        %v937 = vmax.f32 %v889, %v921
        %v938 = vmax.f32 %v890, %v922
        %v939 = vmax.f32 %v891, %v923
        %v940 = vmax.f32 %v892, %v924
        %v941 = vmax.f32 %v893, %v925
        %v942 = vmax.f32 %v894, %v926
        %v943 = vmax.f32 %v895, %v927
        %v944 = vmax.f32 %v896, %v928
        %v945 = vmax.f32 %v897, %v929
        %v946 = vmax.f32 %v898, %v930
        %v947 = vmax.f32 %v899, %v931
        %v948 = vmax.f32 %v900, %v932
        %v949 = vmax.f32 %v901, %v933
        %v950 = vmax.f32 %v902, %v934
        %v951 = vmax.f32 %v903, %v935
        %v952 = vsel %vm856, inf, %v751
        %v953 = vsel %vm858, inf, %v753
        %v954 = vsel %vm860, inf, %v755
        %v955 = vsel %vm862, inf, %v757
        %v956 = vsel %vm864, inf, %v759
        %v957 = vsel %vm866, inf, %v761
        %v958 = vsel %vm868, inf, %v763
        %v959 = vsel %vm870, inf, %v765
        %v960 = vsel %vm872, inf, %v767
        %v961 = vsel %vm874, inf, %v769
        %v962 = vsel %vm876, inf, %v771
        %v963 = vsel %vm878, inf, %v773
        %v964 = vsel %vm880, inf, %v775
        %v965 = vsel %vm882, inf, %v777
        %v966 = vsel %vm884, inf, %v779
        %v967 = vsel %vm886, inf, %v781
        %v968 = vmin.f32 %v904, %v952
        %v969 = vmin.f32 %v905, %v953
        %v970 = vmin.f32 %v906, %v954
        %v971 = vmin.f32 %v907, %v955
        %v972 = vmin.f32 %v908, %v956
        %v973 = vmin.f32 %v909, %v957
        %v974 = vmin.f32 %v910, %v958
        %v975 = vmin.f32 %v911, %v959
        %v976 = vmin.f32 %v912, %v960
        %v977 = vmin.f32 %v913, %v961
        %v978 = vmin.f32 %v914, %v962
        %v979 = vmin.f32 %v915, %v963
        %v980 = vmin.f32 %v916, %v964
        %v981 = vmin.f32 %v917, %v965
        %v982 = vmin.f32 %v918, %v966
        %v983 = vmin.f32 %v919, %v967
        %v984 = vsel %vm857, %v752, -inf
        %v985 = vsel %vm859, %v754, -inf
        %v986 = vsel %vm861, %v756, -inf
        %v987 = vsel %vm863, %v758, -inf
        %v988 = vsel %vm865, %v760, -inf
        %v989 = vsel %vm867, %v762, -inf
        %v990 = vsel %vm869, %v764, -inf
        %v991 = vsel %vm871, %v766, -inf
        %v992 = vsel %vm873, %v768, -inf
        %v993 = vsel %vm875, %v770, -inf
        %v994 = vsel %vm877, %v772, -inf
        %v995 = vsel %vm879, %v774, -inf
        %v996 = vsel %vm881, %v776, -inf
        %v997 = vsel %vm883, %v778, -inf
        %v998 = vsel %vm885, %v780, -inf
        %v999 = vsel %vm887, %v782, -inf
        %v1000 = vmax.f32 %v936, %v984
        %v1001 = vmax.f32 %v937, %v985
        %v1002 = vmax.f32 %v938, %v986
        %v1003 = vmax.f32 %v939, %v987
        %v1004 = vmax.f32 %v940, %v988
        %v1005 = vmax.f32 %v941, %v989
        %v1006 = vmax.f32 %v942, %v990
        %v1007 = vmax.f32 %v943, %v991
        %v1008 = vmax.f32 %v944, %v992
        %v1009 = vmax.f32 %v945, %v993
        %v1010 = vmax.f32 %v946, %v994
        %v1011 = vmax.f32 %v947, %v995
        %v1012 = vmax.f32 %v948, %v996
        %v1013 = vmax.f32 %v949, %v997
        %v1014 = vmax.f32 %v950, %v998
        %v1015 = vmax.f32 %v951, %v999
        %v1016 = vsel %vm857, inf, %v752
        %v1017 = vsel %vm859, inf, %v754
        %v1018 = vsel %vm861, inf, %v756
        %v1019 = vsel %vm863, inf, %v758
        %v1020 = vsel %vm865, inf, %v760
        %v1021 = vsel %vm867, inf, %v762
        %v1022 = vsel %vm869, inf, %v764
        %v1023 = vsel %vm871, inf, %v766
        %v1024 = vsel %vm873, inf, %v768
        %v1025 = vsel %vm875, inf, %v770
        %v1026 = vsel %vm877, inf, %v772
        %v1027 = vsel %vm879, inf, %v774
        %v1028 = vsel %vm881, inf, %v776
        %v1029 = vsel %vm883, inf, %v778
        %v1030 = vsel %vm885, inf, %v780
        %v1031 = vsel %vm887, inf, %v782
        %v1032 = vmin.f32 %v968, %v1016
        %v1033 = vmin.f32 %v969, %v1017
        %v1034 = vmin.f32 %v970, %v1018
        %v1035 = vmin.f32 %v971, %v1019
        %v1036 = vmin.f32 %v972, %v1020
        %v1037 = vmin.f32 %v973, %v1021
        %v1038 = vmin.f32 %v974, %v1022
        %v1039 = vmin.f32 %v975, %v1023
        %v1040 = vmin.f32 %v976, %v1024
        %v1041 = vmin.f32 %v977, %v1025
        %v1042 = vmin.f32 %v978, %v1026
        %v1043 = vmin.f32 %v979, %v1027
        %v1044 = vmin.f32 %v980, %v1028
        %v1045 = vmin.f32 %v981, %v1029
        %v1046 = vmin.f32 %v982, %v1030
        %v1047 = vmin.f32 %v983, %v1031
        %1048 = vst [vmem:[#allocation2] sm:$0xff] %v1000
        %1049 = vst [vmem:[#allocation2 + $0x8] sm:$0xff] %v1001
        %1050 = vst [vmem:[#allocation2 + $0x10] sm:$0xff] %v1002
        %1051 = vst [vmem:[#allocation2 + $0x18] sm:$0xff] %v1003
        %1052 = vst [vmem:[#allocation2 + $0x20] sm:$0xff] %v1004
        %1053 = vst [vmem:[#allocation2 + $0x28] sm:$0xff] %v1005
        %1054 = vst [vmem:[#allocation2 + $0x30] sm:$0xff] %v1006
        %1055 = vst [vmem:[#allocation2 + $0x38] sm:$0xff] %v1007
        %1056 = vst [vmem:[#allocation2 + $0x40] sm:$0xff] %v1008
        %1057 = vst [vmem:[#allocation2 + $0x48] sm:$0xff] %v1009
        %1058 = vst [vmem:[#allocation2 + $0x50] sm:$0xff] %v1010
        %1059 = vst [vmem:[#allocation2 + $0x58] sm:$0xff] %v1011
        %1060 = vst [vmem:[#allocation2 + $0x60] sm:$0xff] %v1012
        %1061 = vst [vmem:[#allocation2 + $0x68] sm:$0xff] %v1013
        %1062 = vst [vmem:[#allocation2 + $0x70] sm:$0xff] %v1014
        %1063 = vst [vmem:[#allocation2 + $0x78] sm:$0xff] %v1015
        %1064 = vst [vmem:[#allocation3] sm:$0xff] %v1032
        %1065 = vst [vmem:[#allocation3 + $0x8] sm:$0xff] %v1033
        %1066 = vst [vmem:[#allocation3 + $0x10] sm:$0xff] %v1034
        %1067 = vst [vmem:[#allocation3 + $0x18] sm:$0xff] %v1035
        %1068 = vst [vmem:[#allocation3 + $0x20] sm:$0xff] %v1036
        %1069 = vst [vmem:[#allocation3 + $0x28] sm:$0xff] %v1037
        %1070 = vst [vmem:[#allocation3 + $0x30] sm:$0xff] %v1038
        %1071 = vst [vmem:[#allocation3 + $0x38] sm:$0xff] %v1039
        %1072 = vst [vmem:[#allocation3 + $0x40] sm:$0xff] %v1040
        %1073 = vst [vmem:[#allocation3 + $0x48] sm:$0xff] %v1041
        %1074 = vst [vmem:[#allocation3 + $0x50] sm:$0xff] %v1042
        %1075 = vst [vmem:[#allocation3 + $0x58] sm:$0xff] %v1043
        %1076 = vst [vmem:[#allocation3 + $0x60] sm:$0xff] %v1044
        %1077 = vst [vmem:[#allocation3 + $0x68] sm:$0xff] %v1045
        %1078 = vst [vmem:[#allocation3 + $0x70] sm:$0xff] %v1046
        %1079 = vst [vmem:[#allocation3 + $0x78] sm:$0xff] %v1047
        // Predicated region
        $region49: #{tpu_custom_call.1} parent=43 // pred_check
          %p1080 = pneg %p347
        $region50: #{tpu_custom_call.1} parent=43 // pred_check_branch
          %1082 = sbr.rel (%p1080) target = $region52
        $region51: #{tpu_custom_call.1} parent=43 // pred_region
          %v1083 = vld [vmem:[%s339] sm:$0xff]
          %v1084 = vld [vmem:[%s339 + $0x8] sm:$0xff]
          %v1085 = vld [vmem:[%s339 + $0x10] sm:$0xff]
          %v1086 = vld [vmem:[%s339 + $0x18] sm:$0xff]
          %v1087 = vld [vmem:[%s339 + $0x20] sm:$0xff]
          %v1088 = vld [vmem:[%s339 + $0x28] sm:$0xff]
          %v1089 = vld [vmem:[%s339 + $0x30] sm:$0xff]
          %v1090 = vld [vmem:[%s339 + $0x38] sm:$0xff]
          %v1091 = vld [vmem:[%s339 + $0x40] sm:$0xff]
          %v1092 = vld [vmem:[%s339 + $0x48] sm:$0xff]
          %v1093 = vld [vmem:[%s339 + $0x50] sm:$0xff]
          %v1094 = vld [vmem:[%s339 + $0x58] sm:$0xff]
          %v1095 = vld [vmem:[%s339 + $0x60] sm:$0xff]
          %v1096 = vld [vmem:[%s339 + $0x68] sm:$0xff]
          %v1097 = vld [vmem:[%s339 + $0x70] sm:$0xff]
          %v1098 = vld [vmem:[%s339 + $0x78] sm:$0xff]
          %v1099 = vld [vmem:[#allocation2] sm:$0xff]
          %v1100 = vld [vmem:[#allocation2 + $0x8] sm:$0xff]
          %v1101 = vld [vmem:[#allocation2 + $0x10] sm:$0xff]
          %v1102 = vld [vmem:[#allocation2 + $0x18] sm:$0xff]
          %v1103 = vld [vmem:[#allocation2 + $0x20] sm:$0xff]
          %v1104 = vld [vmem:[#allocation2 + $0x28] sm:$0xff]
          %v1105 = vld [vmem:[#allocation2 + $0x30] sm:$0xff]
          %v1106 = vld [vmem:[#allocation2 + $0x38] sm:$0xff]
          %v1107 = vld [vmem:[#allocation2 + $0x40] sm:$0xff]
          %v1108 = vld [vmem:[#allocation2 + $0x48] sm:$0xff]
          %v1109 = vld [vmem:[#allocation2 + $0x50] sm:$0xff]
          %v1110 = vld [vmem:[#allocation2 + $0x58] sm:$0xff]
          %v1111 = vld [vmem:[#allocation2 + $0x60] sm:$0xff]
          %v1112 = vld [vmem:[#allocation2 + $0x68] sm:$0xff]
          %v1113 = vld [vmem:[#allocation2 + $0x70] sm:$0xff]
          %v1114 = vld [vmem:[#allocation2 + $0x78] sm:$0xff]
          %1115 = vmax.xlane.f32.xlu0 %v1099
          %v1116 = vpop.xlane.xlu0 %1115
          %1117 = vmax.xlane.f32.xlu0 %v1100
          %v1118 = vpop.xlane.xlu0 %1117
          %1119 = vmax.xlane.f32.xlu0 %v1101
          %v1120 = vpop.xlane.xlu0 %1119
          %1121 = vmax.xlane.f32.xlu0 %v1102
          %v1122 = vpop.xlane.xlu0 %1121
          %1123 = vmax.xlane.f32.xlu0 %v1103
          %v1124 = vpop.xlane.xlu0 %1123
          %1125 = vmax.xlane.f32.xlu0 %v1104
          %v1126 = vpop.xlane.xlu0 %1125
          %1127 = vmax.xlane.f32.xlu0 %v1105
          %v1128 = vpop.xlane.xlu0 %1127
          %1129 = vmax.xlane.f32.xlu0 %v1106
          %v1130 = vpop.xlane.xlu0 %1129
          %1131 = vmax.xlane.f32.xlu0 %v1107
          %v1132 = vpop.xlane.xlu0 %1131
          %1133 = vmax.xlane.f32.xlu0 %v1108
          %v1134 = vpop.xlane.xlu0 %1133
          %1135 = vmax.xlane.f32.xlu0 %v1109
          %v1136 = vpop.xlane.xlu0 %1135
          %1137 = vmax.xlane.f32.xlu0 %v1110
          %v1138 = vpop.xlane.xlu0 %1137
          %1139 = vmax.xlane.f32.xlu0 %v1111
          %v1140 = vpop.xlane.xlu0 %1139
          %1141 = vmax.xlane.f32.xlu0 %v1112
          %v1142 = vpop.xlane.xlu0 %1141
          %1143 = vmax.xlane.f32.xlu0 %v1113
          %v1144 = vpop.xlane.xlu0 %1143
          %1145 = vmax.xlane.f32.xlu0 %v1114
          %v1146 = vpop.xlane.xlu0 %1145
          %v1147 = vmul.f32 %v1116, 2.0
          %v1148 = vmul.f32 %v1118, 2.0
          %v1149 = vmul.f32 %v1120, 2.0
          %v1150 = vmul.f32 %v1122, 2.0
          %v1151 = vmul.f32 %v1124, 2.0
          %v1152 = vmul.f32 %v1126, 2.0
          %v1153 = vmul.f32 %v1128, 2.0
          %v1154 = vmul.f32 %v1130, 2.0
          %v1155 = vmul.f32 %v1132, 2.0
          %v1156 = vmul.f32 %v1134, 2.0
          %v1157 = vmul.f32 %v1136, 2.0
          %v1158 = vmul.f32 %v1138, 2.0
          %v1159 = vmul.f32 %v1140, 2.0
          %v1160 = vmul.f32 %v1142, 2.0
          %v1161 = vmul.f32 %v1144, 2.0
          %v1162 = vmul.f32 %v1146, 2.0
          %v1163 = vadd.f32 %v1083, %v1147
          %v1164 = vadd.f32 %v1084, %v1148
          %v1165 = vadd.f32 %v1085, %v1149
          %v1166 = vadd.f32 %v1086, %v1150
          %v1167 = vadd.f32 %v1087, %v1151
          %v1168 = vadd.f32 %v1088, %v1152
          %v1169 = vadd.f32 %v1089, %v1153
          %v1170 = vadd.f32 %v1090, %v1154
          %v1171 = vadd.f32 %v1091, %v1155
          %v1172 = vadd.f32 %v1092, %v1156
          %v1173 = vadd.f32 %v1093, %v1157
          %v1174 = vadd.f32 %v1094, %v1158
          %v1175 = vadd.f32 %v1095, %v1159
          %v1176 = vadd.f32 %v1096, %v1160
          %v1177 = vadd.f32 %v1097, %v1161
          %v1178 = vadd.f32 %v1098, %v1162
          %v1179 = vld [vmem:[#allocation3] sm:$0xff]
          %v1180 = vld [vmem:[#allocation3 + $0x8] sm:$0xff]
          %v1181 = vld [vmem:[#allocation3 + $0x10] sm:$0xff]
          %v1182 = vld [vmem:[#allocation3 + $0x18] sm:$0xff]
          %v1183 = vld [vmem:[#allocation3 + $0x20] sm:$0xff]
          %v1184 = vld [vmem:[#allocation3 + $0x28] sm:$0xff]
          %v1185 = vld [vmem:[#allocation3 + $0x30] sm:$0xff]
          %v1186 = vld [vmem:[#allocation3 + $0x38] sm:$0xff]
          %v1187 = vld [vmem:[#allocation3 + $0x40] sm:$0xff]
          %v1188 = vld [vmem:[#allocation3 + $0x48] sm:$0xff]
          %v1189 = vld [vmem:[#allocation3 + $0x50] sm:$0xff]
          %v1190 = vld [vmem:[#allocation3 + $0x58] sm:$0xff]
          %v1191 = vld [vmem:[#allocation3 + $0x60] sm:$0xff]
          %v1192 = vld [vmem:[#allocation3 + $0x68] sm:$0xff]
          %v1193 = vld [vmem:[#allocation3 + $0x70] sm:$0xff]
          %v1194 = vld [vmem:[#allocation3 + $0x78] sm:$0xff]
          %1195 = vmin.xlane.f32.xlu0 %v1179
          %v1196 = vpop.xlane.xlu0 %1195
          %1197 = vmin.xlane.f32.xlu0 %v1180
          %v1198 = vpop.xlane.xlu0 %1197
          %1199 = vmin.xlane.f32.xlu0 %v1181
          %v1200 = vpop.xlane.xlu0 %1199
          %1201 = vmin.xlane.f32.xlu0 %v1182
          %v1202 = vpop.xlane.xlu0 %1201
          %1203 = vmin.xlane.f32.xlu0 %v1183
          %v1204 = vpop.xlane.xlu0 %1203
          %1205 = vmin.xlane.f32.xlu0 %v1184
          %v1206 = vpop.xlane.xlu0 %1205
          %1207 = vmin.xlane.f32.xlu0 %v1185
          %v1208 = vpop.xlane.xlu0 %1207
          %1209 = vmin.xlane.f32.xlu0 %v1186
          %v1210 = vpop.xlane.xlu0 %1209
          %1211 = vmin.xlane.f32.xlu0 %v1187
          %v1212 = vpop.xlane.xlu0 %1211
          %1213 = vmin.xlane.f32.xlu0 %v1188
          %v1214 = vpop.xlane.xlu0 %1213
          %1215 = vmin.xlane.f32.xlu0 %v1189
          %v1216 = vpop.xlane.xlu0 %1215
          %1217 = vmin.xlane.f32.xlu0 %v1190
          %v1218 = vpop.xlane.xlu0 %1217
          %1219 = vmin.xlane.f32.xlu0 %v1191
          %v1220 = vpop.xlane.xlu0 %1219
          %1221 = vmin.xlane.f32.xlu0 %v1192
          %v1222 = vpop.xlane.xlu0 %1221
          %1223 = vmin.xlane.f32.xlu0 %v1193
          %v1224 = vpop.xlane.xlu0 %1223
          %1225 = vmin.xlane.f32.xlu0 %v1194
          %v1226 = vpop.xlane.xlu0 %1225
          %v1227 = vmul.f32 %v1196, 2.0
          %v1228 = vmul.f32 %v1198, 2.0
          %v1229 = vmul.f32 %v1200, 2.0
          %v1230 = vmul.f32 %v1202, 2.0
          %v1231 = vmul.f32 %v1204, 2.0
          %v1232 = vmul.f32 %v1206, 2.0
          %v1233 = vmul.f32 %v1208, 2.0
          %v1234 = vmul.f32 %v1210, 2.0
          %v1235 = vmul.f32 %v1212, 2.0
          %v1236 = vmul.f32 %v1214, 2.0
          %v1237 = vmul.f32 %v1216, 2.0
          %v1238 = vmul.f32 %v1218, 2.0
          %v1239 = vmul.f32 %v1220, 2.0
          %v1240 = vmul.f32 %v1222, 2.0
          %v1241 = vmul.f32 %v1224, 2.0
          %v1242 = vmul.f32 %v1226, 2.0
          %v1243 = vadd.f32 %v1083, %v1227
          %v1244 = vadd.f32 %v1084, %v1228
          %v1245 = vadd.f32 %v1085, %v1229
          %v1246 = vadd.f32 %v1086, %v1230
          %v1247 = vadd.f32 %v1087, %v1231
          %v1248 = vadd.f32 %v1088, %v1232
          %v1249 = vadd.f32 %v1089, %v1233
          %v1250 = vadd.f32 %v1090, %v1234
          %v1251 = vadd.f32 %v1091, %v1235
          %v1252 = vadd.f32 %v1092, %v1236
          %v1253 = vadd.f32 %v1093, %v1237
          %v1254 = vadd.f32 %v1094, %v1238
          %v1255 = vadd.f32 %v1095, %v1239
          %v1256 = vadd.f32 %v1096, %v1240
          %v1257 = vadd.f32 %v1097, %v1241
          %v1258 = vadd.f32 %v1098, %v1242
          %v1259 = vmax.f32 %v1163, 1e-12
          %v1260 = vmax.f32 %v1164, 1e-12
          %v1261 = vmax.f32 %v1165, 1e-12
          %v1262 = vmax.f32 %v1166, 1e-12
          %v1263 = vmax.f32 %v1167, 1e-12
          %v1264 = vmax.f32 %v1168, 1e-12
          %v1265 = vmax.f32 %v1169, 1e-12
          %v1266 = vmax.f32 %v1170, 1e-12
          %v1267 = vmax.f32 %v1171, 1e-12
          %v1268 = vmax.f32 %v1172, 1e-12
          %v1269 = vmax.f32 %v1173, 1e-12
          %v1270 = vmax.f32 %v1174, 1e-12
          %v1271 = vmax.f32 %v1175, 1e-12
          %v1272 = vmax.f32 %v1176, 1e-12
          %v1273 = vmax.f32 %v1177, 1e-12
          %v1274 = vmax.f32 %v1178, 1e-12
          %v1275 = vrsqrt.pop %v1259
          %v1276 = vmul.f32 %v1259, %v1275
          %vm1277 = vcmp.eq.f32.partialorder %v1259, inf
          %v1278 = vsel %vm1277, %v1259, %v1276
          %vm1279 = vcmp.eq.f32.partialorder %v1259, 0.0
          %v1280 = vand.u32 %v1259, 2147483648
          %v1281 = vsel %vm1279, %v1280, %v1278
          %v1282 = vrsqrt.pop %v1260
          %v1283 = vmul.f32 %v1260, %v1282
          %vm1284 = vcmp.eq.f32.partialorder %v1260, inf
          %v1285 = vsel %vm1284, %v1260, %v1283
          %vm1286 = vcmp.eq.f32.partialorder %v1260, 0.0
          %v1287 = vand.u32 %v1260, 2147483648
          %v1288 = vsel %vm1286, %v1287, %v1285
          %v1289 = vrsqrt.pop %v1261
          %v1290 = vmul.f32 %v1261, %v1289
          %vm1291 = vcmp.eq.f32.partialorder %v1261, inf
          %v1292 = vsel %vm1291, %v1261, %v1290
          %vm1293 = vcmp.eq.f32.partialorder %v1261, 0.0
          %v1294 = vand.u32 %v1261, 2147483648
          %v1295 = vsel %vm1293, %v1294, %v1292
          %v1296 = vrsqrt.pop %v1262
          %v1297 = vmul.f32 %v1262, %v1296
          %vm1298 = vcmp.eq.f32.partialorder %v1262, inf
          %v1299 = vsel %vm1298, %v1262, %v1297
          %vm1300 = vcmp.eq.f32.partialorder %v1262, 0.0
          %v1301 = vand.u32 %v1262, 2147483648
          %v1302 = vsel %vm1300, %v1301, %v1299
          %v1303 = vrsqrt.pop %v1263
          %v1304 = vmul.f32 %v1263, %v1303
          %vm1305 = vcmp.eq.f32.partialorder %v1263, inf
          %v1306 = vsel %vm1305, %v1263, %v1304
          %vm1307 = vcmp.eq.f32.partialorder %v1263, 0.0
          %v1308 = vand.u32 %v1263, 2147483648
          %v1309 = vsel %vm1307, %v1308, %v1306
          %v1310 = vrsqrt.pop %v1264
          %v1311 = vmul.f32 %v1264, %v1310
          %vm1312 = vcmp.eq.f32.partialorder %v1264, inf
          %v1313 = vsel %vm1312, %v1264, %v1311
          %vm1314 = vcmp.eq.f32.partialorder %v1264, 0.0
          %v1315 = vand.u32 %v1264, 2147483648
          %v1316 = vsel %vm1314, %v1315, %v1313
          %v1317 = vrsqrt.pop %v1265
          %v1318 = vmul.f32 %v1265, %v1317
          %vm1319 = vcmp.eq.f32.partialorder %v1265, inf
          %v1320 = vsel %vm1319, %v1265, %v1318
          %vm1321 = vcmp.eq.f32.partialorder %v1265, 0.0
          %v1322 = vand.u32 %v1265, 2147483648
          %v1323 = vsel %vm1321, %v1322, %v1320
          %v1324 = vrsqrt.pop %v1266
          %v1325 = vmul.f32 %v1266, %v1324
          %vm1326 = vcmp.eq.f32.partialorder %v1266, inf
          %v1327 = vsel %vm1326, %v1266, %v1325
          %vm1328 = vcmp.eq.f32.partialorder %v1266, 0.0
          %v1329 = vand.u32 %v1266, 2147483648
          %v1330 = vsel %vm1328, %v1329, %v1327
          %v1331 = vrsqrt.pop %v1267
          %v1332 = vmul.f32 %v1267, %v1331
          %vm1333 = vcmp.eq.f32.partialorder %v1267, inf
          %v1334 = vsel %vm1333, %v1267, %v1332
          %vm1335 = vcmp.eq.f32.partialorder %v1267, 0.0
          %v1336 = vand.u32 %v1267, 2147483648
          %v1337 = vsel %vm1335, %v1336, %v1334
          %v1338 = vrsqrt.pop %v1268
          %v1339 = vmul.f32 %v1268, %v1338
          %vm1340 = vcmp.eq.f32.partialorder %v1268, inf
          %v1341 = vsel %vm1340, %v1268, %v1339
          %vm1342 = vcmp.eq.f32.partialorder %v1268, 0.0
          %v1343 = vand.u32 %v1268, 2147483648
          %v1344 = vsel %vm1342, %v1343, %v1341
          %v1345 = vrsqrt.pop %v1269
          %v1346 = vmul.f32 %v1269, %v1345
          %vm1347 = vcmp.eq.f32.partialorder %v1269, inf
          %v1348 = vsel %vm1347, %v1269, %v1346
          %vm1349 = vcmp.eq.f32.partialorder %v1269, 0.0
          %v1350 = vand.u32 %v1269, 2147483648
          %v1351 = vsel %vm1349, %v1350, %v1348
          %v1352 = vrsqrt.pop %v1270
          %v1353 = vmul.f32 %v1270, %v1352
          %vm1354 = vcmp.eq.f32.partialorder %v1270, inf
          %v1355 = vsel %vm1354, %v1270, %v1353
          %vm1356 = vcmp.eq.f32.partialorder %v1270, 0.0
          %v1357 = vand.u32 %v1270, 2147483648
          %v1358 = vsel %vm1356, %v1357, %v1355
          %v1359 = vrsqrt.pop %v1271
          %v1360 = vmul.f32 %v1271, %v1359
          %vm1361 = vcmp.eq.f32.partialorder %v1271, inf
          %v1362 = vsel %vm1361, %v1271, %v1360
          %vm1363 = vcmp.eq.f32.partialorder %v1271, 0.0
          %v1364 = vand.u32 %v1271, 2147483648
          %v1365 = vsel %vm1363, %v1364, %v1362
          %v1366 = vrsqrt.pop %v1272
          %v1367 = vmul.f32 %v1272, %v1366
          %vm1368 = vcmp.eq.f32.partialorder %v1272, inf
          %v1369 = vsel %vm1368, %v1272, %v1367
          %vm1370 = vcmp.eq.f32.partialorder %v1272, 0.0
          %v1371 = vand.u32 %v1272, 2147483648
          %v1372 = vsel %vm1370, %v1371, %v1369
          %v1373 = vrsqrt.pop %v1273
          %v1374 = vmul.f32 %v1273, %v1373
          %vm1375 = vcmp.eq.f32.partialorder %v1273, inf
          %v1376 = vsel %vm1375, %v1273, %v1374
          %vm1377 = vcmp.eq.f32.partialorder %v1273, 0.0
          %v1378 = vand.u32 %v1273, 2147483648
          %v1379 = vsel %vm1377, %v1378, %v1376
          %v1380 = vrsqrt.pop %v1274
          %v1381 = vmul.f32 %v1274, %v1380
          %vm1382 = vcmp.eq.f32.partialorder %v1274, inf
          %v1383 = vsel %vm1382, %v1274, %v1381
          %vm1384 = vcmp.eq.f32.partialorder %v1274, 0.0
          %v1385 = vand.u32 %v1274, 2147483648
          %v1386 = vsel %vm1384, %v1385, %v1383
          %v1387 = vmax.f32 %v1243, 1e-12
          %v1388 = vmax.f32 %v1244, 1e-12
          %v1389 = vmax.f32 %v1245, 1e-12
          %v1390 = vmax.f32 %v1246, 1e-12
          %v1391 = vmax.f32 %v1247, 1e-12
          %v1392 = vmax.f32 %v1248, 1e-12
          %v1393 = vmax.f32 %v1249, 1e-12
          %v1394 = vmax.f32 %v1250, 1e-12
          %v1395 = vmax.f32 %v1251, 1e-12
          %v1396 = vmax.f32 %v1252, 1e-12
          %v1397 = vmax.f32 %v1253, 1e-12
          %v1398 = vmax.f32 %v1254, 1e-12
          %v1399 = vmax.f32 %v1255, 1e-12
          %v1400 = vmax.f32 %v1256, 1e-12
          %v1401 = vmax.f32 %v1257, 1e-12
          %v1402 = vmax.f32 %v1258, 1e-12
          %v1403 = vrsqrt.pop %v1387
          %v1404 = vmul.f32 %v1387, %v1403
          %vm1405 = vcmp.eq.f32.partialorder %v1387, inf
          %v1406 = vsel %vm1405, %v1387, %v1404
          %vm1407 = vcmp.eq.f32.partialorder %v1387, 0.0
          %v1408 = vand.u32 %v1387, 2147483648
          %v1409 = vsel %vm1407, %v1408, %v1406
          %v1410 = vrsqrt.pop %v1388
          %v1411 = vmul.f32 %v1388, %v1410
          %vm1412 = vcmp.eq.f32.partialorder %v1388, inf
          %v1413 = vsel %vm1412, %v1388, %v1411
          %vm1414 = vcmp.eq.f32.partialorder %v1388, 0.0
          %v1415 = vand.u32 %v1388, 2147483648
          %v1416 = vsel %vm1414, %v1415, %v1413
          %v1417 = vrsqrt.pop %v1389
          %v1418 = vmul.f32 %v1389, %v1417
          %vm1419 = vcmp.eq.f32.partialorder %v1389, inf
          %v1420 = vsel %vm1419, %v1389, %v1418
          %vm1421 = vcmp.eq.f32.partialorder %v1389, 0.0
          %v1422 = vand.u32 %v1389, 2147483648
          %v1423 = vsel %vm1421, %v1422, %v1420
          %v1424 = vrsqrt.pop %v1390
          %v1425 = vmul.f32 %v1390, %v1424
          %vm1426 = vcmp.eq.f32.partialorder %v1390, inf
          %v1427 = vsel %vm1426, %v1390, %v1425
          %vm1428 = vcmp.eq.f32.partialorder %v1390, 0.0
          %v1429 = vand.u32 %v1390, 2147483648
          %v1430 = vsel %vm1428, %v1429, %v1427
          %v1431 = vrsqrt.pop %v1391
          %v1432 = vmul.f32 %v1391, %v1431
          %vm1433 = vcmp.eq.f32.partialorder %v1391, inf
          %v1434 = vsel %vm1433, %v1391, %v1432
          %vm1435 = vcmp.eq.f32.partialorder %v1391, 0.0
          %v1436 = vand.u32 %v1391, 2147483648
          %v1437 = vsel %vm1435, %v1436, %v1434
          %v1438 = vrsqrt.pop %v1392
          %v1439 = vmul.f32 %v1392, %v1438
          %vm1440 = vcmp.eq.f32.partialorder %v1392, inf
          %v1441 = vsel %vm1440, %v1392, %v1439
          %vm1442 = vcmp.eq.f32.partialorder %v1392, 0.0
          %v1443 = vand.u32 %v1392, 2147483648
          %v1444 = vsel %vm1442, %v1443, %v1441
          %v1445 = vrsqrt.pop %v1393
          %v1446 = vmul.f32 %v1393, %v1445
          %vm1447 = vcmp.eq.f32.partialorder %v1393, inf
          %v1448 = vsel %vm1447, %v1393, %v1446
          %vm1449 = vcmp.eq.f32.partialorder %v1393, 0.0
          %v1450 = vand.u32 %v1393, 2147483648
          %v1451 = vsel %vm1449, %v1450, %v1448
          %v1452 = vrsqrt.pop %v1394
          %v1453 = vmul.f32 %v1394, %v1452
          %vm1454 = vcmp.eq.f32.partialorder %v1394, inf
          %v1455 = vsel %vm1454, %v1394, %v1453
          %vm1456 = vcmp.eq.f32.partialorder %v1394, 0.0
          %v1457 = vand.u32 %v1394, 2147483648
          %v1458 = vsel %vm1456, %v1457, %v1455
          %v1459 = vrsqrt.pop %v1395
          %v1460 = vmul.f32 %v1395, %v1459
          %vm1461 = vcmp.eq.f32.partialorder %v1395, inf
          %v1462 = vsel %vm1461, %v1395, %v1460
          %vm1463 = vcmp.eq.f32.partialorder %v1395, 0.0
          %v1464 = vand.u32 %v1395, 2147483648
          %v1465 = vsel %vm1463, %v1464, %v1462
          %v1466 = vrsqrt.pop %v1396
          %v1467 = vmul.f32 %v1396, %v1466
          %vm1468 = vcmp.eq.f32.partialorder %v1396, inf
          %v1469 = vsel %vm1468, %v1396, %v1467
          %vm1470 = vcmp.eq.f32.partialorder %v1396, 0.0
          %v1471 = vand.u32 %v1396, 2147483648
          %v1472 = vsel %vm1470, %v1471, %v1469
          %v1473 = vrsqrt.pop %v1397
          %v1474 = vmul.f32 %v1397, %v1473
          %vm1475 = vcmp.eq.f32.partialorder %v1397, inf
          %v1476 = vsel %vm1475, %v1397, %v1474
          %vm1477 = vcmp.eq.f32.partialorder %v1397, 0.0
          %v1478 = vand.u32 %v1397, 2147483648
          %v1479 = vsel %vm1477, %v1478, %v1476
          %v1480 = vrsqrt.pop %v1398
          %v1481 = vmul.f32 %v1398, %v1480
          %vm1482 = vcmp.eq.f32.partialorder %v1398, inf
          %v1483 = vsel %vm1482, %v1398, %v1481
          %vm1484 = vcmp.eq.f32.partialorder %v1398, 0.0
          %v1485 = vand.u32 %v1398, 2147483648
          %v1486 = vsel %vm1484, %v1485, %v1483
          %v1487 = vrsqrt.pop %v1399
          %v1488 = vmul.f32 %v1399, %v1487
          %vm1489 = vcmp.eq.f32.partialorder %v1399, inf
          %v1490 = vsel %vm1489, %v1399, %v1488
          %vm1491 = vcmp.eq.f32.partialorder %v1399, 0.0
          %v1492 = vand.u32 %v1399, 2147483648
          %v1493 = vsel %vm1491, %v1492, %v1490
          %v1494 = vrsqrt.pop %v1400
          %v1495 = vmul.f32 %v1400, %v1494
          %vm1496 = vcmp.eq.f32.partialorder %v1400, inf
          %v1497 = vsel %vm1496, %v1400, %v1495
          %vm1498 = vcmp.eq.f32.partialorder %v1400, 0.0
          %v1499 = vand.u32 %v1400, 2147483648
          %v1500 = vsel %vm1498, %v1499, %v1497
          %v1501 = vrsqrt.pop %v1401
          %v1502 = vmul.f32 %v1401, %v1501
          %vm1503 = vcmp.eq.f32.partialorder %v1401, inf
          %v1504 = vsel %vm1503, %v1401, %v1502
          %vm1505 = vcmp.eq.f32.partialorder %v1401, 0.0
          %v1506 = vand.u32 %v1401, 2147483648
          %v1507 = vsel %vm1505, %v1506, %v1504
          %v1508 = vrsqrt.pop %v1402
          %v1509 = vmul.f32 %v1402, %v1508
          %vm1510 = vcmp.eq.f32.partialorder %v1402, inf
          %v1511 = vsel %vm1510, %v1402, %v1509
          %vm1512 = vcmp.eq.f32.partialorder %v1402, 0.0
          %v1513 = vand.u32 %v1402, 2147483648
          %v1514 = vsel %vm1512, %v1513, %v1511
          %v1515 = vsub.f32 %v1281, %v1409
          %v1516 = vsub.f32 %v1288, %v1416
          %v1517 = vsub.f32 %v1295, %v1423
          %v1518 = vsub.f32 %v1302, %v1430
          %v1519 = vsub.f32 %v1309, %v1437
          %v1520 = vsub.f32 %v1316, %v1444
          %v1521 = vsub.f32 %v1323, %v1451
          %v1522 = vsub.f32 %v1330, %v1458
          %v1523 = vsub.f32 %v1337, %v1465
          %v1524 = vsub.f32 %v1344, %v1472
          %v1525 = vsub.f32 %v1351, %v1479
          %v1526 = vsub.f32 %v1358, %v1486
          %v1527 = vsub.f32 %v1365, %v1493
          %v1528 = vsub.f32 %v1372, %v1500
          %v1529 = vsub.f32 %v1379, %v1507
          %v1530 = vsub.f32 %v1386, %v1514
          %v1531 = vadd.f32 %v1515, 0.3
          %v1532 = vadd.f32 %v1516, 0.3
          %v1533 = vadd.f32 %v1517, 0.3
          %v1534 = vadd.f32 %v1518, 0.3
          %v1535 = vadd.f32 %v1519, 0.3
          %v1536 = vadd.f32 %v1520, 0.3
          %v1537 = vadd.f32 %v1521, 0.3
          %v1538 = vadd.f32 %v1522, 0.3
          %v1539 = vadd.f32 %v1523, 0.3
          %v1540 = vadd.f32 %v1524, 0.3
          %v1541 = vadd.f32 %v1525, 0.3
          %v1542 = vadd.f32 %v1526, 0.3
          %v1543 = vadd.f32 %v1527, 0.3
          %v1544 = vadd.f32 %v1528, 0.3
          %v1545 = vadd.f32 %v1529, 0.3
          %v1546 = vadd.f32 %v1530, 0.3
          %v1547 = vmax.f32 %v1531, 0.0
          %v1548 = vmax.f32 %v1532, 0.0
          %v1549 = vmax.f32 %v1533, 0.0
          %v1550 = vmax.f32 %v1534, 0.0
          %v1551 = vmax.f32 %v1535, 0.0
          %v1552 = vmax.f32 %v1536, 0.0
          %v1553 = vmax.f32 %v1537, 0.0
          %v1554 = vmax.f32 %v1538, 0.0
          %v1555 = vmax.f32 %v1539, 0.0
          %v1556 = vmax.f32 %v1540, 0.0
          %v1557 = vmax.f32 %v1541, 0.0
          %v1558 = vmax.f32 %v1542, 0.0
          %v1559 = vmax.f32 %v1543, 0.0
          %v1560 = vmax.f32 %v1544, 0.0
          %v1561 = vmax.f32 %v1545, 0.0
          %v1562 = vmax.f32 %v1546, 0.0
          %s1563 = smul.u32 %s24, 128
          %v1564 = vlaneseq
          %v1565 = vshrl.u32 %v1564, 7
          %v1566 = vadd.s32 %v1565, 8
          %v1567 = vadd.s32 %v1565, 16
          %v1568 = vadd.s32 %v1565, 24
          %v1569 = vadd.s32 %v1565, 32
          %v1570 = vadd.s32 %v1565, 40
          %v1571 = vadd.s32 %v1565, 48
          %v1572 = vadd.s32 %v1565, 56
          %v1573 = vadd.s32 %v1565, 64
          %v1574 = vadd.s32 %v1565, 72
          %v1575 = vadd.s32 %v1565, 80
          %v1576 = vadd.s32 %v1565, 88
          %v1577 = vadd.s32 %v1565, 96
          %v1578 = vadd.s32 %v1565, 104
          %v1579 = vadd.s32 %v1565, 112
          %v1580 = vadd.s32 %v1565, 120
          %v1581 = vstv %s1563
          %v1582 = vadd.s32 %v1581, %v1565
          %v1583 = vadd.s32 %v1581, %v1566
          %v1584 = vadd.s32 %v1581, %v1567
          %v1585 = vadd.s32 %v1581, %v1568
          %v1586 = vadd.s32 %v1581, %v1569
          %v1587 = vadd.s32 %v1581, %v1570
          %v1588 = vadd.s32 %v1581, %v1571
          %v1589 = vadd.s32 %v1581, %v1572
          %v1590 = vadd.s32 %v1581, %v1573
          %v1591 = vadd.s32 %v1581, %v1574
          %v1592 = vadd.s32 %v1581, %v1575
          %v1593 = vadd.s32 %v1581, %v1576
          %v1594 = vadd.s32 %v1581, %v1577
          %v1595 = vadd.s32 %v1581, %v1578
          %v1596 = vadd.s32 %v1581, %v1579
          %v1597 = vadd.s32 %v1581, %v1580
          %vm1598 = vcmp.lt.s32.totalorder %v1582, 200
          %vm1599 = vcmp.lt.s32.totalorder %v1583, 200
          %vm1600 = vcmp.lt.s32.totalorder %v1584, 200
          %vm1601 = vcmp.lt.s32.totalorder %v1585, 200
          %vm1602 = vcmp.lt.s32.totalorder %v1586, 200
          %vm1603 = vcmp.lt.s32.totalorder %v1587, 200
          %vm1604 = vcmp.lt.s32.totalorder %v1588, 200
          %vm1605 = vcmp.lt.s32.totalorder %v1589, 200
          %vm1606 = vcmp.lt.s32.totalorder %v1590, 200
          %vm1607 = vcmp.lt.s32.totalorder %v1591, 200
          %vm1608 = vcmp.lt.s32.totalorder %v1592, 200
          %vm1609 = vcmp.lt.s32.totalorder %v1593, 200
          %vm1610 = vcmp.lt.s32.totalorder %v1594, 200
          %vm1611 = vcmp.lt.s32.totalorder %v1595, 200
          %vm1612 = vcmp.lt.s32.totalorder %v1596, 200
          %vm1613 = vcmp.lt.s32.totalorder %v1597, 200
          %v1614 = vsel %vm1598, %v1547, 0.0
          %v1615 = vsel %vm1599, %v1548, 0.0
          %v1616 = vsel %vm1600, %v1549, 0.0
          %v1617 = vsel %vm1601, %v1550, 0.0
          %v1618 = vsel %vm1602, %v1551, 0.0
          %v1619 = vsel %vm1603, %v1552, 0.0
          %v1620 = vsel %vm1604, %v1553, 0.0
          %v1621 = vsel %vm1605, %v1554, 0.0
          %v1622 = vsel %vm1606, %v1555, 0.0
          %v1623 = vsel %vm1607, %v1556, 0.0
          %v1624 = vsel %vm1608, %v1557, 0.0
          %v1625 = vsel %vm1609, %v1558, 0.0
          %v1626 = vsel %vm1610, %v1559, 0.0
          %v1627 = vsel %vm1611, %v1560, 0.0
          %v1628 = vsel %vm1612, %v1561, 0.0
          %v1629 = vsel %vm1613, %v1562, 0.0
          %1631 = vset.pattern.permute.xlu0 0
          %1632 = vperm.xlu0 %1631, %v1614
          %v1633 = vpop.permute.xlu0 %1632
          %1636 = vset.pattern.permute.xlu0 0
          %1637 = vperm.xlu0 %1636, %v1615
          %v1638 = vpop.permute.xlu0 %1637
          %1641 = vset.pattern.permute.xlu0 0
          %1642 = vperm.xlu0 %1641, %v1616
          %v1643 = vpop.permute.xlu0 %1642
          %1646 = vset.pattern.permute.xlu0 0
          %1647 = vperm.xlu0 %1646, %v1617
          %v1648 = vpop.permute.xlu0 %1647
          %1651 = vset.pattern.permute.xlu0 0
          %1652 = vperm.xlu0 %1651, %v1618
          %v1653 = vpop.permute.xlu0 %1652
          %1656 = vset.pattern.permute.xlu0 0
          %1657 = vperm.xlu0 %1656, %v1619
          %v1658 = vpop.permute.xlu0 %1657
          %1661 = vset.pattern.permute.xlu0 0
          %1662 = vperm.xlu0 %1661, %v1620
          %v1663 = vpop.permute.xlu0 %1662
          %1666 = vset.pattern.permute.xlu0 0
          %1667 = vperm.xlu0 %1666, %v1621
          %v1668 = vpop.permute.xlu0 %1667
          %1671 = vset.pattern.permute.xlu0 0
          %1672 = vperm.xlu0 %1671, %v1622
          %v1673 = vpop.permute.xlu0 %1672
          %1676 = vset.pattern.permute.xlu0 0
          %1677 = vperm.xlu0 %1676, %v1623
          %v1678 = vpop.permute.xlu0 %1677
          %1681 = vset.pattern.permute.xlu0 0
          %1682 = vperm.xlu0 %1681, %v1624
          %v1683 = vpop.permute.xlu0 %1682
          %1686 = vset.pattern.permute.xlu0 0
          %1687 = vperm.xlu0 %1686, %v1625
          %v1688 = vpop.permute.xlu0 %1687
          %1691 = vset.pattern.permute.xlu0 0
          %1692 = vperm.xlu0 %1691, %v1626
          %v1693 = vpop.permute.xlu0 %1692
          %1696 = vset.pattern.permute.xlu0 0
          %1697 = vperm.xlu0 %1696, %v1627
          %v1698 = vpop.permute.xlu0 %1697
          %1701 = vset.pattern.permute.xlu0 0
          %1702 = vperm.xlu0 %1701, %v1628
          %v1703 = vpop.permute.xlu0 %1702
          %1706 = vset.pattern.permute.xlu0 0
          %1707 = vperm.xlu0 %1706, %v1629
          %v1708 = vpop.permute.xlu0 %1707
          %1710 = vst [vmem:[%s317] sm:$0xff] %v1633
          %1711 = vst [vmem:[%s317 + $0x8] sm:$0xff] %v1638
          %1712 = vst [vmem:[%s317 + $0x10] sm:$0xff] %v1643
          %1713 = vst [vmem:[%s317 + $0x18] sm:$0xff] %v1648
          %1714 = vst [vmem:[%s317 + $0x20] sm:$0xff] %v1653
          %1715 = vst [vmem:[%s317 + $0x28] sm:$0xff] %v1658
          %1716 = vst [vmem:[%s317 + $0x30] sm:$0xff] %v1663
          %1717 = vst [vmem:[%s317 + $0x38] sm:$0xff] %v1668
          %1718 = vst [vmem:[%s317 + $0x40] sm:$0xff] %v1673
          %1719 = vst [vmem:[%s317 + $0x48] sm:$0xff] %v1678
          %1720 = vst [vmem:[%s317 + $0x50] sm:$0xff] %v1683
          %1721 = vst [vmem:[%s317 + $0x58] sm:$0xff] %v1688
          %1722 = vst [vmem:[%s317 + $0x60] sm:$0xff] %v1693
          %1723 = vst [vmem:[%s317 + $0x68] sm:$0xff] %v1698
          %1724 = vst [vmem:[%s317 + $0x70] sm:$0xff] %v1703
          %1725 = vst [vmem:[%s317 + $0x78] sm:$0xff] %v1708
        $region52: #{tpu_custom_call.1} parent=43 // pred_fallthru
          _
        %s1726 = sand.u32 %s191, 1
        %s1727 = scalar_lea.sflag [#allocation5], %s1726
        %s1728 = sand.u32 %s191, 1
        %s1729 = smul.addr %s1728, 128
        %s1730 = scalar_lea.vmem [#allocation4], %s1729
        // Predicated region
        $region53: #{tpu_custom_call.1} parent=43 // pred_check
          %p1731 = pneg %p201
        $region54: #{tpu_custom_call.1} parent=43 // pred_check_branch
          %1733 = sbr.rel (%p1731) target = $region56
        $region55: #{tpu_custom_call.1} parent=43 // pred_region
          %s1734 = smul.u32 16, %s24
          %s1736 = ssub.s32 2048, 2048
          %1737 = vsyncadd %s1727, %s1736
          %s1738 = smul.addr %s1734, 128
          %s1739 = scalar_lea.hbm %s6, %s1738
          %s1740 = sshll.u32 %s1730, 4
          %s1741 = int_to_ptr.vmem [resolvable:$true] %s1740
          %1746 = dma.vmem_to_hbm [thread:$0]  %s1741, 2048, %s1739, %s1727, 128, 128, 8
        $region56: #{tpu_custom_call.1} parent=43 // pred_fallthru
          _
      $region44: #{tpu_custom_call.1} parent=5 // pred_fallthru
        _
      %p1747 = scmp.le.s32.totalorder 2, %s15
      // Predicated region
      $region57: #{tpu_custom_call.1} parent=5 // pred_check
        %p1748 = pneg %p1747
      $region58: #{tpu_custom_call.1} parent=5 // pred_check_branch
        %1750 = sbr.rel (%p1748) target = $region60
      $region59: #{tpu_custom_call.1} parent=5 // pred_region
        %s1751 = ssub.s32 %s15, 2
        // Predicated region
        $region61: #{tpu_custom_call.1} parent=59 // pred_check
          %p1752 = pneg %p207
        $region62: #{tpu_custom_call.1} parent=59 // pred_check_branch
          %1754 = sbr.rel (%p1752) target = $region64
        $region63: #{tpu_custom_call.1} parent=59 // pred_region
          %s1755 = sand.u32 %s192, 1
          %s1756 = scalar_lea.sflag [#allocation5], %s1755
          %s1757 = sand.u32 %s192, 1
          %s1758 = smul.addr %s1757, 128
          %s1759 = scalar_lea.vmem [#allocation4], %s1758
          %1760 = dma.done %s1756, 2048
        $region64: #{tpu_custom_call.1} parent=59 // pred_fallthru
          _
      $region60: #{tpu_custom_call.1} parent=5 // pred_fallthru
        _
    $region6: #{tpu_custom_call.1} parent=1 // loop_footer
      %s19 = sadd.s32 1, %s15
    $region7: #{tpu_custom_call.1} parent=1 // loop_footer_branch
      %14 = sbr.rel target = $region3
    $region8: #{tpu_custom_call.1} parent=1 // loop_exit
      _
    %1761 = vsyncpa [#allocation5], 1
    %s1762 = scalar_lea.sflag [#allocation5], 1
    %1763 = vsyncpa %s1762, 1

</llo_original>
